<compile_context>
chip_gen: v5e
topology: v5e:2x2
jax: 0.10.0
libtpu: 0.0.40
codegen_flags: <defaults>
</compile_context>

<pallas_src>
import functools
import math

import jax
import jax.numpy as jnp
from jax.experimental import pallas as pl
from jax.experimental.pallas import tpu as pltpu


# ----------------------------------------------------------------------------
# Pallas kernel: one LSTM layer, both directions fused, time-chunked.
#   grid = (num_dir, T // T_CHUNK); the chunk axis is the inner / serial one.
#   gx_ref  : (T_CHUNK, B, 4H)  precomputed x @ W_ih + bias for this chunk
#   whh_ref : (H, 4H)           recurrent weights for this direction (resident)
#   y_ref   : (T_CHUNK, B, H)   per-step hidden outputs (forward time order)
#   hN_ref  : (B, H)            final hidden state of this direction
#   h_sc/c_sc : (B, H) f32      recurrent carry across time chunks
# ----------------------------------------------------------------------------
def _bidir_lstm_chunk_kernel(gx_ref, whh_ref, y_ref, hN_ref, h_sc, c_sc, *,
                             unroll):
    d = pl.program_id(0)             # direction: 0 = forward, 1 = backward
    chunk = pl.program_id(1)
    n_chunks = pl.num_programs(1)

    @pl.when(chunk == 0)
    def _():
        h_sc[...] = jnp.zeros_like(h_sc)
        c_sc[...] = jnp.zeros_like(c_sc)

    whh = whh_ref[...]               # (H, 4H), resident across the whole chain
    tc = gx_ref.shape[0]             # T_CHUNK (static)
    H = whh.shape[0]

    def step(s, carry):
        h, c = carry
        # Local time index inside the chunk: ascending for the forward
        # direction, descending for the backward direction (no flips needed).
        lt = (1 - d) * s + d * (tc - 1 - s)
        gates = gx_ref[lt] + jnp.dot(h, whh,
                                     preferred_element_type=jnp.float32)
        i_g = jax.nn.sigmoid(gates[:, 0 * H:1 * H])
        f_g = jax.nn.sigmoid(gates[:, 1 * H:2 * H])
        g_g = jnp.tanh(gates[:, 2 * H:3 * H])
        o_g = jax.nn.sigmoid(gates[:, 3 * H:4 * H])
        c_new = f_g * c + i_g * g_g
        h_new = o_g * jnp.tanh(c_new)
        y_ref[lt] = h_new            # already lands in forward time order
        return h_new, c_new

    h_fin, c_fin = jax.lax.fori_loop(0, tc, step,
                                     (h_sc[...], c_sc[...]), unroll=unroll)
    h_sc[...] = h_fin
    c_sc[...] = c_fin

    # Only the very last time chunk holds this direction's final hidden state.
    @pl.when(chunk == n_chunks - 1)
    def _():
        hN_ref[...] = h_fin


def _choose_time_chunk(T, max_chunk=64):
    """Largest divisor of T that is <= max_chunk (amortizes grid overhead)."""
    for c in range(min(T, max_chunk), 0, -1):
        if T % c == 0:
            return c
    return 1


def _run_bidir_layer(x_tbf, w_ih_t, w_hh_t, bias):
    """One LSTM layer, all directions fused in a single pallas_call.

    x_tbf  : (T, B, In) time-major input (forward time order)
    w_ih_t : (D, In, 4H), w_hh_t : (D, H, 4H), bias : (D, 4H)
    Returns y (D, T, B, H) in forward time order, h_n (D, B, H).
    """
    T, B, _ = x_tbf.shape
    D, H = w_hh_t.shape[0], w_hh_t.shape[1]
    G = 4 * H

    # Hoisted input projection: one big batched matmul for all timesteps and
    # both directions, done once outside the serial recurrent chain.
    gates_x = jnp.einsum("tbf,dfg->dtbg", x_tbf, w_ih_t,
                         precision=jax.lax.Precision.HIGHEST,
                         preferred_element_type=jnp.float32)
    gates_x = gates_x + bias[:, None, None, :]        # (D, T, B, 4H)

    tc = _choose_time_chunk(T)
    n_chunks = T // tc
    # Fully unroll short chunks (proven cheap); partially unroll long ones so
    # the LLO scheduler sees several steps at once without code-size blowup.
    unroll = True if tc <= 16 else 8

    def xy_map(d, c):
        # Forward direction walks time chunks in ascending order, backward in
        # descending order; within-chunk reversal is handled in the kernel.
        return (d, (1 - d) * c + d * (n_chunks - 1 - c), 0, 0)

    grid_spec = pltpu.PrefetchScalarGridSpec(
        num_scalar_prefetch=0,
        grid=(D, n_chunks),
        in_specs=[
            pl.BlockSpec((None, tc, B, G), xy_map),              # gates_x chunk
            pl.BlockSpec((None, H, G), lambda d, c: (d, 0, 0)),  # W_hh^T
        ],
        out_specs=[
            pl.BlockSpec((None, tc, B, H), xy_map),              # y chunk
            pl.BlockSpec((None, B, H), lambda d, c: (d, 0, 0)),  # final h
        ],
        scratch_shapes=[
            pltpu.VMEM((B, H), jnp.float32),   # h carry
            pltpu.VMEM((B, H), jnp.float32),   # c carry
        ],
    )

    y, h_n = pl.pallas_call(
        functools.partial(_bidir_lstm_chunk_kernel, unroll=unroll),
        grid_spec=grid_spec,
        out_shape=(
            jax.ShapeDtypeStruct((D, T, B, H), jnp.float32),
            jax.ShapeDtypeStruct((D, B, H), jnp.float32),
        ),
        compiler_params=pltpu.CompilerParams(
            # direction axis is independent (can shard across TensorCores);
            # time-chunk axis is the serial recurrence.
            dimension_semantics=("parallel", "arbitrary"),
        ),
    )(gates_x, w_hh_t)
    return y, h_n


# ----------------------------------------------------------------------------
# Full module: multi-layer, (optionally) bidirectional LSTM feature extractor.
# ----------------------------------------------------------------------------
def init_lstm_params(key, n_features, hidden, num_layers, bidirectional):
    """PyTorch-shaped params, stacked over directions and stored transposed:
    per layer -> (W_ih^T (D,In,4H), W_hh^T (D,H,4H), b_ih+b_hh (D,4H))."""
    num_dir = 2 if bidirectional else 1
    bound = 1.0 / math.sqrt(hidden)
    params = {}
    for layer in range(num_layers):
        in_size = n_features if layer == 0 else hidden * num_dir
        wihs, whhs, biases = [], [], []
        for _ in range(num_dir):
            key, k1, k2, k3, k4 = jax.random.split(key, 5)
            w_ih = jax.random.uniform(k1, (4 * hidden, in_size), jnp.float32,
                                      -bound, bound)
            w_hh = jax.random.uniform(k2, (4 * hidden, hidden), jnp.float32,
                                      -bound, bound)
            b_ih = jax.random.uniform(k3, (4 * hidden,), jnp.float32,
                                      -bound, bound)
            b_hh = jax.random.uniform(k4, (4 * hidden,), jnp.float32,
                                      -bound, bound)
            wihs.append(w_ih.T)          # (In, 4H)
            whhs.append(w_hh.T)          # (H, 4H)
            biases.append(b_ih + b_hh)   # (4H,)
        params[layer] = (jnp.stack(wihs), jnp.stack(whhs), jnp.stack(biases))
    return params


@functools.partial(jax.jit, static_argnames=("num_layers", "bidirectional"))
def lstm_feature_extractor(s, params, num_layers, bidirectional):
    """s: (B, T, n_features) batch_first, like the PyTorch module.
    Returns hid.view(B, -1) with PyTorch's (L*D, B, H) row-major flattening."""
    B, _, _ = s.shape
    num_dir = 2 if bidirectional else 1

    inp = jnp.transpose(s, (1, 0, 2)).astype(jnp.float32)   # (T, B, F)
    final_hiddens = []
    for layer in range(num_layers):
        w_ih_t, w_hh_t, bias = params[layer]
        y, h_n = _run_bidir_layer(inp, w_ih_t, w_hh_t, bias)
        final_hiddens.append(h_n)                            # (D, B, H)
        # next layer input: concat directions along the feature dim
        inp = jnp.concatenate([y[d] for d in range(num_dir)], axis=-1)

    hid = jnp.concatenate(final_hiddens, axis=0)             # (L*D, B, H)
    # PyTorch: hid.view(hid.size(1), -1) -> raw row-major reinterpretation.
    return jnp.reshape(hid, (B, -1))


# ----------------------------------------------------------------------------
# Pure-JAX reference (lax.scan) for a correctness cross-check.
# ----------------------------------------------------------------------------
def _ref_lstm_layer(x_tbf, w_ih_t, w_hh_t, bias):
    _, B, _ = x_tbf.shape
    H = w_hh_t.shape[0]

    def step(carry, x_t):
        h, c = carry
        gates = (jnp.dot(x_t, w_ih_t, precision=jax.lax.Precision.HIGHEST)
                 + jnp.dot(h, w_hh_t, precision=jax.lax.Precision.HIGHEST)
                 + bias)
        i = jax.nn.sigmoid(gates[:, :H])
        f = jax.nn.sigmoid(gates[:, H:2 * H])
        g = jnp.tanh(gates[:, 2 * H:3 * H])
        o = jax.nn.sigmoid(gates[:, 3 * H:])
        c = f * c + i * g
        h = o * jnp.tanh(c)
        return (h, c), h

    (h_n, c_n), y = jax.lax.scan(step,
                                 (jnp.zeros((B, H), jnp.float32),
                                  jnp.zeros((B, H), jnp.float32)),
                                 x_tbf)
    return y, h_n, c_n


def _ref_feature_extractor(s, params, num_layers, bidirectional):
    B = s.shape[0]
    num_dir = 2 if bidirectional else 1
    inp = jnp.transpose(s, (1, 0, 2)).astype(jnp.float32)
    hids = []
    for layer in range(num_layers):
        w_ih_t, w_hh_t, bias = params[layer]
        outs = []
        for d in range(num_dir):
            x_dir = inp if d == 0 else jnp.flip(inp, axis=0)
            y, h_n, _ = _ref_lstm_layer(x_dir, w_ih_t[d], w_hh_t[d],
                                        bias[d][None, :])
            if d == 1:
                y = jnp.flip(y, axis=0)
            outs.append(y)
            hids.append(h_n)
        inp = jnp.concatenate(outs, axis=-1)
    hid = jnp.stack(hids, axis=0)
    return jnp.reshape(hid, (B, -1))


if __name__ == "__main__":
    # args-equivalent config (small shapes)
    n_features = 4
    n_rnn_hidden = 32
    n_rnn_layers = 2
    bidirectional = True
    batch, seq = 2, 8

    key = jax.random.PRNGKey(0)
    k_params, k_input = jax.random.split(key)

    params = init_lstm_params(k_params, n_features, n_rnn_hidden,
                              n_rnn_layers, bidirectional)
    s = jax.random.normal(k_input, (batch, seq, n_features), jnp.float32)

    out = lstm_feature_extractor(s, params, n_rnn_layers, bidirectional)
    out = jax.block_until_ready(out)

    ref = jax.block_until_ready(
        _ref_feature_extractor(s, params, n_rnn_layers, bidirectional))

    assert out.shape == (batch, n_rnn_layers * (2 if bidirectional else 1)
                         * n_rnn_hidden), out.shape
    assert jnp.allclose(out, ref, atol=1e-5, rtol=1e-5), "mismatch vs reference"

    print("KERNEL_OK")
</pallas_src>

<mosaic_0001>
module attributes {stable_mosaic.version = 11 : i64} {
  func.func @_bidir_lstm_chunk_kernel(%arg0: i32, %arg1: i32, %arg2: memref<1x8x2x128xf32, #tpu.memory_space<vmem>>, %arg3: memref<1x32x128xf32, #tpu.memory_space<vmem>>, %arg4: memref<1x8x2x32xf32, #tpu.memory_space<vmem>>, %arg5: memref<1x2x32xf32, #tpu.memory_space<vmem>>, %arg6: memref<2x32xf32, #tpu.memory_space<vmem>>, %arg7: memref<2x32xf32, #tpu.memory_space<vmem>>) attributes {dimension_semantics = [#tpu.dimension_semantics<parallel>, #tpu.dimension_semantics<arbitrary>], iteration_bounds = array<i64: 2, 1>, scalar_prefetch = 0 : i64, scratch_operands = 2 : i64, tpu.core_type = #tpu.core_type<tc>, window_params = [{transform_indices = @transform_0, window_bounds = array<i64: 1, 8, 2, 128>}, {transform_indices = @transform_1, window_bounds = array<i64: 1, 32, 128>}, {transform_indices = @transform_2, window_bounds = array<i64: 1, 8, 2, 32>}, {transform_indices = @transform_3, window_bounds = array<i64: 1, 2, 32>}]} {
    %c0_i32 = arith.constant 0 : i32
    %0 = arith.cmpi eq, %arg1, %c0_i32 : i32
    %1 = arith.extui %0 : i1 to i32
    %c0_i32_0 = arith.constant 0 : i32
    %2 = arith.cmpi ne, %1, %c0_i32_0 : i32
    scf.if %2 {
      %cst_109 = arith.constant 0.000000e+00 : f32
      %324 = vector.broadcast %cst_109 : f32 to vector<2x32xf32>
      %c0_110 = arith.constant 0 : index
      %c0_111 = arith.constant 0 : index
      %325 = vector.load %arg6[%c0_110, %c0_111] : memref<2x32xf32, #tpu.memory_space<vmem>>, vector<2x32xf32>
      tpu.vector_store %arg6[%c0_110, %c0_111], %324 {strides = array<i32>} : memref<2x32xf32, #tpu.memory_space<vmem>>, vector<2x32xf32>,
      %cst_112 = arith.constant 0.000000e+00 : f32
      %326 = vector.broadcast %cst_112 : f32 to vector<2x32xf32>
      %c0_113 = arith.constant 0 : index
      %c0_114 = arith.constant 0 : index
      %327 = vector.load %arg7[%c0_113, %c0_114] : memref<2x32xf32, #tpu.memory_space<vmem>>, vector<2x32xf32>
      tpu.vector_store %arg7[%c0_113, %c0_114], %326 {strides = array<i32>} : memref<2x32xf32, #tpu.memory_space<vmem>>, vector<2x32xf32>,
    } else {
    }
    %c0 = arith.constant 0 : index
    %c0_1 = arith.constant 0 : index
    %c0_2 = arith.constant 0 : index
    %3 = vector.load %arg3[%c0, %c0_1, %c0_2] : memref<1x32x128xf32, #tpu.memory_space<vmem>>, vector<1x32x128xf32>
    %4 = vector.shape_cast %3 : vector<1x32x128xf32> to vector<32x128xf32>
    %c0_3 = arith.constant 0 : index
    %c0_4 = arith.constant 0 : index
    %5 = vector.load %arg6[%c0_3, %c0_4] : memref<2x32xf32, #tpu.memory_space<vmem>>, vector<2x32xf32>
    %c0_5 = arith.constant 0 : index
    %c0_6 = arith.constant 0 : index
    %6 = vector.load %arg7[%c0_5, %c0_6] : memref<2x32xf32, #tpu.memory_space<vmem>>, vector<2x32xf32>
    %c0_i32_7 = arith.constant 0 : i32
    %c1_i32 = arith.constant 1 : i32
    %7 = arith.subi %c1_i32, %arg0 : i32
    %8 = arith.muli %7, %c0_i32_7 : i32
    %c7_i32 = arith.constant 7 : i32
    %9 = arith.subi %c7_i32, %c0_i32_7 : i32
    %10 = arith.muli %arg0, %9 : i32
    %11 = arith.addi %8, %10 : i32
    %c0_8 = arith.constant 0 : index
    %12 = arith.index_cast %11 : i32 to index
    %c0_9 = arith.constant 0 : index
    %c0_10 = arith.constant 0 : index
    %13 = vector.load %arg2[%c0_8, %12, %c0_9, %c0_10] : memref<1x8x2x128xf32, #tpu.memory_space<vmem>>, vector<1x1x2x128xf32>
    %14 = vector.shape_cast %13 : vector<1x1x2x128xf32> to vector<2x128xf32>
    %cst = arith.constant dense<0.000000e+00> : vector<2x128xf32>
    %15 = tpu.matmul %5, %4, %cst {dimension_numbers = #tpu.dot_dimension_numbers<[1], [0], [0], [1], [0, 0, 1, 1], [], []>} : vector<2x32xf32>, vector<32x128xf32>, vector<2x128xf32> -> vector<2x128xf32>
    %16 = arith.addf %14, %15 : vector<2x128xf32>
    %17 = vector.extract_strided_slice %16 {offsets = [0, 0], sizes = [2, 32], strides = [1, 1]} : vector<2x128xf32> to vector<2x32xf32>
    %18 = arith.negf %17 : vector<2x32xf32>
    %19 = math.exp %18 : vector<2x32xf32>
    %cst_11 = arith.constant 1.000000e+00 : f32
    %20 = vector.broadcast %cst_11 : f32 to vector<2x32xf32>
    %21 = arith.addf %20, %19 : vector<2x32xf32>
    %22 = arith.divf %20, %21 : vector<2x32xf32>
    %23 = vector.extract_strided_slice %16 {offsets = [0, 32], sizes = [2, 32], strides = [1, 1]} : vector<2x128xf32> to vector<2x32xf32>
    %24 = arith.negf %23 : vector<2x32xf32>
    %25 = math.exp %24 : vector<2x32xf32>
    %cst_12 = arith.constant 1.000000e+00 : f32
    %26 = vector.broadcast %cst_12 : f32 to vector<2x32xf32>
    %27 = arith.addf %26, %25 : vector<2x32xf32>
    %28 = arith.divf %26, %27 : vector<2x32xf32>
    %29 = vector.extract_strided_slice %16 {offsets = [0, 64], sizes = [2, 32], strides = [1, 1]} : vector<2x128xf32> to vector<2x32xf32>
    %30 = math.tanh %29 : vector<2x32xf32>
    %31 = vector.extract_strided_slice %16 {offsets = [0, 96], sizes = [2, 32], strides = [1, 1]} : vector<2x128xf32> to vector<2x32xf32>
    %32 = arith.negf %31 : vector<2x32xf32>
    %33 = math.exp %32 : vector<2x32xf32>
    %cst_13 = arith.constant 1.000000e+00 : f32
    %34 = vector.broadcast %cst_13 : f32 to vector<2x32xf32>
    %35 = arith.addf %34, %33 : vector<2x32xf32>
    %36 = arith.divf %34, %35 : vector<2x32xf32>
    %37 = arith.mulf %28, %6 : vector<2x32xf32>
    %38 = arith.mulf %22, %30 : vector<2x32xf32>
    %39 = arith.addf %37, %38 : vector<2x32xf32>
    %40 = math.tanh %39 : vector<2x32xf32>
    %41 = arith.mulf %36, %40 : vector<2x32xf32>
    %c0_14 = arith.constant 0 : index
    %42 = arith.index_cast %11 : i32 to index
    %c0_15 = arith.constant 0 : index
    %c0_16 = arith.constant 0 : index
    %43 = vector.load %arg4[%c0_14, %42, %c0_15, %c0_16] : memref<1x8x2x32xf32, #tpu.memory_space<vmem>>, vector<1x1x2x32xf32>
    %44 = vector.shape_cast %43 : vector<1x1x2x32xf32> to vector<2x32xf32>
    %45 = vector.shape_cast %41 : vector<2x32xf32> to vector<1x1x2x32xf32>
    tpu.vector_store %arg4[%c0_14, %42, %c0_15, %c0_16], %45 {strides = array<i32>} : memref<1x8x2x32xf32, #tpu.memory_space<vmem>>, vector<1x1x2x32xf32>,
    %c1_i32_17 = arith.constant 1 : i32
    %c1_i32_18 = arith.constant 1 : i32
    %46 = arith.subi %c1_i32_18, %arg0 : i32
    %47 = arith.muli %46, %c1_i32_17 : i32
    %c7_i32_19 = arith.constant 7 : i32
    %48 = arith.subi %c7_i32_19, %c1_i32_17 : i32
    %49 = arith.muli %arg0, %48 : i32
    %50 = arith.addi %47, %49 : i32
    %c0_20 = arith.constant 0 : index
    %51 = arith.index_cast %50 : i32 to index
    %c0_21 = arith.constant 0 : index
    %c0_22 = arith.constant 0 : index
    %52 = vector.load %arg2[%c0_20, %51, %c0_21, %c0_22] : memref<1x8x2x128xf32, #tpu.memory_space<vmem>>, vector<1x1x2x128xf32>
    %53 = vector.shape_cast %52 : vector<1x1x2x128xf32> to vector<2x128xf32>
    %cst_23 = arith.constant dense<0.000000e+00> : vector<2x128xf32>
    %54 = tpu.matmul %41, %4, %cst_23 {dimension_numbers = #tpu.dot_dimension_numbers<[1], [0], [0], [1], [0, 0, 1, 1], [], []>} : vector<2x32xf32>, vector<32x128xf32>, vector<2x128xf32> -> vector<2x128xf32>
    %55 = arith.addf %53, %54 : vector<2x128xf32>
    %56 = vector.extract_strided_slice %55 {offsets = [0, 0], sizes = [2, 32], strides = [1, 1]} : vector<2x128xf32> to vector<2x32xf32>
    %57 = arith.negf %56 : vector<2x32xf32>
    %58 = math.exp %57 : vector<2x32xf32>
    %cst_24 = arith.constant 1.000000e+00 : f32
    %59 = vector.broadcast %cst_24 : f32 to vector<2x32xf32>
    %60 = arith.addf %59, %58 : vector<2x32xf32>
    %61 = arith.divf %59, %60 : vector<2x32xf32>
    %62 = vector.extract_strided_slice %55 {offsets = [0, 32], sizes = [2, 32], strides = [1, 1]} : vector<2x128xf32> to vector<2x32xf32>
    %63 = arith.negf %62 : vector<2x32xf32>
    %64 = math.exp %63 : vector<2x32xf32>
    %cst_25 = arith.constant 1.000000e+00 : f32
    %65 = vector.broadcast %cst_25 : f32 to vector<2x32xf32>
    %66 = arith.addf %65, %64 : vector<2x32xf32>
    %67 = arith.divf %65, %66 : vector<2x32xf32>
    %68 = vector.extract_strided_slice %55 {offsets = [0, 64], sizes = [2, 32], strides = [1, 1]} : vector<2x128xf32> to vector<2x32xf32>
    %69 = math.tanh %68 : vector<2x32xf32>
    %70 = vector.extract_strided_slice %55 {offsets = [0, 96], sizes = [2, 32], strides = [1, 1]} : vector<2x128xf32> to vector<2x32xf32>
    %71 = arith.negf %70 : vector<2x32xf32>
    %72 = math.exp %71 : vector<2x32xf32>
    %cst_26 = arith.constant 1.000000e+00 : f32
    %73 = vector.broadcast %cst_26 : f32 to vector<2x32xf32>
    %74 = arith.addf %73, %72 : vector<2x32xf32>
    %75 = arith.divf %73, %74 : vector<2x32xf32>
    %76 = arith.mulf %67, %39 : vector<2x32xf32>
    %77 = arith.mulf %61, %69 : vector<2x32xf32>
    %78 = arith.addf %76, %77 : vector<2x32xf32>
    %79 = math.tanh %78 : vector<2x32xf32>
    %80 = arith.mulf %75, %79 : vector<2x32xf32>
    %c0_27 = arith.constant 0 : index
    %81 = arith.index_cast %50 : i32 to index
    %c0_28 = arith.constant 0 : index
    %c0_29 = arith.constant 0 : index
    %82 = vector.load %arg4[%c0_27, %81, %c0_28, %c0_29] : memref<1x8x2x32xf32, #tpu.memory_space<vmem>>, vector<1x1x2x32xf32>
    %83 = vector.shape_cast %82 : vector<1x1x2x32xf32> to vector<2x32xf32>
    %84 = vector.shape_cast %80 : vector<2x32xf32> to vector<1x1x2x32xf32>
    tpu.vector_store %arg4[%c0_27, %81, %c0_28, %c0_29], %84 {strides = array<i32>} : memref<1x8x2x32xf32, #tpu.memory_space<vmem>>, vector<1x1x2x32xf32>,
    %c2_i32 = arith.constant 2 : i32
    %c1_i32_30 = arith.constant 1 : i32
    %85 = arith.subi %c1_i32_30, %arg0 : i32
    %86 = arith.muli %85, %c2_i32 : i32
    %c7_i32_31 = arith.constant 7 : i32
    %87 = arith.subi %c7_i32_31, %c2_i32 : i32
    %88 = arith.muli %arg0, %87 : i32
    %89 = arith.addi %86, %88 : i32
    %c0_32 = arith.constant 0 : index
    %90 = arith.index_cast %89 : i32 to index
    %c0_33 = arith.constant 0 : index
    %c0_34 = arith.constant 0 : index
    %91 = vector.load %arg2[%c0_32, %90, %c0_33, %c0_34] : memref<1x8x2x128xf32, #tpu.memory_space<vmem>>, vector<1x1x2x128xf32>
    %92 = vector.shape_cast %91 : vector<1x1x2x128xf32> to vector<2x128xf32>
    %cst_35 = arith.constant dense<0.000000e+00> : vector<2x128xf32>
    %93 = tpu.matmul %80, %4, %cst_35 {dimension_numbers = #tpu.dot_dimension_numbers<[1], [0], [0], [1], [0, 0, 1, 1], [], []>} : vector<2x32xf32>, vector<32x128xf32>, vector<2x128xf32> -> vector<2x128xf32>
    %94 = arith.addf %92, %93 : vector<2x128xf32>
    %95 = vector.extract_strided_slice %94 {offsets = [0, 0], sizes = [2, 32], strides = [1, 1]} : vector<2x128xf32> to vector<2x32xf32>
    %96 = arith.negf %95 : vector<2x32xf32>
    %97 = math.exp %96 : vector<2x32xf32>
    %cst_36 = arith.constant 1.000000e+00 : f32
    %98 = vector.broadcast %cst_36 : f32 to vector<2x32xf32>
    %99 = arith.addf %98, %97 : vector<2x32xf32>
    %100 = arith.divf %98, %99 : vector<2x32xf32>
    %101 = vector.extract_strided_slice %94 {offsets = [0, 32], sizes = [2, 32], strides = [1, 1]} : vector<2x128xf32> to vector<2x32xf32>
    %102 = arith.negf %101 : vector<2x32xf32>
    %103 = math.exp %102 : vector<2x32xf32>
    %cst_37 = arith.constant 1.000000e+00 : f32
    %104 = vector.broadcast %cst_37 : f32 to vector<2x32xf32>
    %105 = arith.addf %104, %103 : vector<2x32xf32>
    %106 = arith.divf %104, %105 : vector<2x32xf32>
    %107 = vector.extract_strided_slice %94 {offsets = [0, 64], sizes = [2, 32], strides = [1, 1]} : vector<2x128xf32> to vector<2x32xf32>
    %108 = math.tanh %107 : vector<2x32xf32>
    %109 = vector.extract_strided_slice %94 {offsets = [0, 96], sizes = [2, 32], strides = [1, 1]} : vector<2x128xf32> to vector<2x32xf32>
    %110 = arith.negf %109 : vector<2x32xf32>
    %111 = math.exp %110 : vector<2x32xf32>
    %cst_38 = arith.constant 1.000000e+00 : f32
    %112 = vector.broadcast %cst_38 : f32 to vector<2x32xf32>
    %113 = arith.addf %112, %111 : vector<2x32xf32>
    %114 = arith.divf %112, %113 : vector<2x32xf32>
    %115 = arith.mulf %106, %78 : vector<2x32xf32>
    %116 = arith.mulf %100, %108 : vector<2x32xf32>
    %117 = arith.addf %115, %116 : vector<2x32xf32>
    %118 = math.tanh %117 : vector<2x32xf32>
    %119 = arith.mulf %114, %118 : vector<2x32xf32>
    %c0_39 = arith.constant 0 : index
    %120 = arith.index_cast %89 : i32 to index
    %c0_40 = arith.constant 0 : index
    %c0_41 = arith.constant 0 : index
    %121 = vector.load %arg4[%c0_39, %120, %c0_40, %c0_41] : memref<1x8x2x32xf32, #tpu.memory_space<vmem>>, vector<1x1x2x32xf32>
    %122 = vector.shape_cast %121 : vector<1x1x2x32xf32> to vector<2x32xf32>
    %123 = vector.shape_cast %119 : vector<2x32xf32> to vector<1x1x2x32xf32>
    tpu.vector_store %arg4[%c0_39, %120, %c0_40, %c0_41], %123 {strides = array<i32>} : memref<1x8x2x32xf32, #tpu.memory_space<vmem>>, vector<1x1x2x32xf32>,
    %c3_i32 = arith.constant 3 : i32
    %c1_i32_42 = arith.constant 1 : i32
    %124 = arith.subi %c1_i32_42, %arg0 : i32
    %125 = arith.muli %124, %c3_i32 : i32
    %c7_i32_43 = arith.constant 7 : i32
    %126 = arith.subi %c7_i32_43, %c3_i32 : i32
    %127 = arith.muli %arg0, %126 : i32
    %128 = arith.addi %125, %127 : i32
    %c0_44 = arith.constant 0 : index
    %129 = arith.index_cast %128 : i32 to index
    %c0_45 = arith.constant 0 : index
    %c0_46 = arith.constant 0 : index
    %130 = vector.load %arg2[%c0_44, %129, %c0_45, %c0_46] : memref<1x8x2x128xf32, #tpu.memory_space<vmem>>, vector<1x1x2x128xf32>
    %131 = vector.shape_cast %130 : vector<1x1x2x128xf32> to vector<2x128xf32>
    %cst_47 = arith.constant dense<0.000000e+00> : vector<2x128xf32>
    %132 = tpu.matmul %119, %4, %cst_47 {dimension_numbers = #tpu.dot_dimension_numbers<[1], [0], [0], [1], [0, 0, 1, 1], [], []>} : vector<2x32xf32>, vector<32x128xf32>, vector<2x128xf32> -> vector<2x128xf32>
    %133 = arith.addf %131, %132 : vector<2x128xf32>
    %134 = vector.extract_strided_slice %133 {offsets = [0, 0], sizes = [2, 32], strides = [1, 1]} : vector<2x128xf32> to vector<2x32xf32>
    %135 = arith.negf %134 : vector<2x32xf32>
    %136 = math.exp %135 : vector<2x32xf32>
    %cst_48 = arith.constant 1.000000e+00 : f32
    %137 = vector.broadcast %cst_48 : f32 to vector<2x32xf32>
    %138 = arith.addf %137, %136 : vector<2x32xf32>
    %139 = arith.divf %137, %138 : vector<2x32xf32>
    %140 = vector.extract_strided_slice %133 {offsets = [0, 32], sizes = [2, 32], strides = [1, 1]} : vector<2x128xf32> to vector<2x32xf32>
    %141 = arith.negf %140 : vector<2x32xf32>
    %142 = math.exp %141 : vector<2x32xf32>
    %cst_49 = arith.constant 1.000000e+00 : f32
    %143 = vector.broadcast %cst_49 : f32 to vector<2x32xf32>
    %144 = arith.addf %143, %142 : vector<2x32xf32>
    %145 = arith.divf %143, %144 : vector<2x32xf32>
    %146 = vector.extract_strided_slice %133 {offsets = [0, 64], sizes = [2, 32], strides = [1, 1]} : vector<2x128xf32> to vector<2x32xf32>
    %147 = math.tanh %146 : vector<2x32xf32>
    %148 = vector.extract_strided_slice %133 {offsets = [0, 96], sizes = [2, 32], strides = [1, 1]} : vector<2x128xf32> to vector<2x32xf32>
    %149 = arith.negf %148 : vector<2x32xf32>
    %150 = math.exp %149 : vector<2x32xf32>
    %cst_50 = arith.constant 1.000000e+00 : f32
    %151 = vector.broadcast %cst_50 : f32 to vector<2x32xf32>
    %152 = arith.addf %151, %150 : vector<2x32xf32>
    %153 = arith.divf %151, %152 : vector<2x32xf32>
    %154 = arith.mulf %145, %117 : vector<2x32xf32>
    %155 = arith.mulf %139, %147 : vector<2x32xf32>
    %156 = arith.addf %154, %155 : vector<2x32xf32>
    %157 = math.tanh %156 : vector<2x32xf32>
    %158 = arith.mulf %153, %157 : vector<2x32xf32>
    %c0_51 = arith.constant 0 : index
    %159 = arith.index_cast %128 : i32 to index
    %c0_52 = arith.constant 0 : index
    %c0_53 = arith.constant 0 : index
    %160 = vector.load %arg4[%c0_51, %159, %c0_52, %c0_53] : memref<1x8x2x32xf32, #tpu.memory_space<vmem>>, vector<1x1x2x32xf32>
    %161 = vector.shape_cast %160 : vector<1x1x2x32xf32> to vector<2x32xf32>
    %162 = vector.shape_cast %158 : vector<2x32xf32> to vector<1x1x2x32xf32>
    tpu.vector_store %arg4[%c0_51, %159, %c0_52, %c0_53], %162 {strides = array<i32>} : memref<1x8x2x32xf32, #tpu.memory_space<vmem>>, vector<1x1x2x32xf32>,
    %c4_i32 = arith.constant 4 : i32
    %c1_i32_54 = arith.constant 1 : i32
    %163 = arith.subi %c1_i32_54, %arg0 : i32
    %164 = arith.muli %163, %c4_i32 : i32
    %c7_i32_55 = arith.constant 7 : i32
    %165 = arith.subi %c7_i32_55, %c4_i32 : i32
    %166 = arith.muli %arg0, %165 : i32
    %167 = arith.addi %164, %166 : i32
    %c0_56 = arith.constant 0 : index
    %168 = arith.index_cast %167 : i32 to index
    %c0_57 = arith.constant 0 : index
    %c0_58 = arith.constant 0 : index
    %169 = vector.load %arg2[%c0_56, %168, %c0_57, %c0_58] : memref<1x8x2x128xf32, #tpu.memory_space<vmem>>, vector<1x1x2x128xf32>
    %170 = vector.shape_cast %169 : vector<1x1x2x128xf32> to vector<2x128xf32>
    %cst_59 = arith.constant dense<0.000000e+00> : vector<2x128xf32>
    %171 = tpu.matmul %158, %4, %cst_59 {dimension_numbers = #tpu.dot_dimension_numbers<[1], [0], [0], [1], [0, 0, 1, 1], [], []>} : vector<2x32xf32>, vector<32x128xf32>, vector<2x128xf32> -> vector<2x128xf32>
    %172 = arith.addf %170, %171 : vector<2x128xf32>
    %173 = vector.extract_strided_slice %172 {offsets = [0, 0], sizes = [2, 32], strides = [1, 1]} : vector<2x128xf32> to vector<2x32xf32>
    %174 = arith.negf %173 : vector<2x32xf32>
    %175 = math.exp %174 : vector<2x32xf32>
    %cst_60 = arith.constant 1.000000e+00 : f32
    %176 = vector.broadcast %cst_60 : f32 to vector<2x32xf32>
    %177 = arith.addf %176, %175 : vector<2x32xf32>
    %178 = arith.divf %176, %177 : vector<2x32xf32>
    %179 = vector.extract_strided_slice %172 {offsets = [0, 32], sizes = [2, 32], strides = [1, 1]} : vector<2x128xf32> to vector<2x32xf32>
    %180 = arith.negf %179 : vector<2x32xf32>
    %181 = math.exp %180 : vector<2x32xf32>
    %cst_61 = arith.constant 1.000000e+00 : f32
    %182 = vector.broadcast %cst_61 : f32 to vector<2x32xf32>
    %183 = arith.addf %182, %181 : vector<2x32xf32>
    %184 = arith.divf %182, %183 : vector<2x32xf32>
    %185 = vector.extract_strided_slice %172 {offsets = [0, 64], sizes = [2, 32], strides = [1, 1]} : vector<2x128xf32> to vector<2x32xf32>
    %186 = math.tanh %185 : vector<2x32xf32>
    %187 = vector.extract_strided_slice %172 {offsets = [0, 96], sizes = [2, 32], strides = [1, 1]} : vector<2x128xf32> to vector<2x32xf32>
    %188 = arith.negf %187 : vector<2x32xf32>
    %189 = math.exp %188 : vector<2x32xf32>
    %cst_62 = arith.constant 1.000000e+00 : f32
    %190 = vector.broadcast %cst_62 : f32 to vector<2x32xf32>
    %191 = arith.addf %190, %189 : vector<2x32xf32>
    %192 = arith.divf %190, %191 : vector<2x32xf32>
    %193 = arith.mulf %184, %156 : vector<2x32xf32>
    %194 = arith.mulf %178, %186 : vector<2x32xf32>
    %195 = arith.addf %193, %194 : vector<2x32xf32>
    %196 = math.tanh %195 : vector<2x32xf32>
    %197 = arith.mulf %192, %196 : vector<2x32xf32>
    %c0_63 = arith.constant 0 : index
    %198 = arith.index_cast %167 : i32 to index
    %c0_64 = arith.constant 0 : index
    %c0_65 = arith.constant 0 : index
    %199 = vector.load %arg4[%c0_63, %198, %c0_64, %c0_65] : memref<1x8x2x32xf32, #tpu.memory_space<vmem>>, vector<1x1x2x32xf32>
    %200 = vector.shape_cast %199 : vector<1x1x2x32xf32> to vector<2x32xf32>
    %201 = vector.shape_cast %197 : vector<2x32xf32> to vector<1x1x2x32xf32>
    tpu.vector_store %arg4[%c0_63, %198, %c0_64, %c0_65], %201 {strides = array<i32>} : memref<1x8x2x32xf32, #tpu.memory_space<vmem>>, vector<1x1x2x32xf32>,
    %c5_i32 = arith.constant 5 : i32
    %c1_i32_66 = arith.constant 1 : i32
    %202 = arith.subi %c1_i32_66, %arg0 : i32
    %203 = arith.muli %202, %c5_i32 : i32
    %c7_i32_67 = arith.constant 7 : i32
    %204 = arith.subi %c7_i32_67, %c5_i32 : i32
    %205 = arith.muli %arg0, %204 : i32
    %206 = arith.addi %203, %205 : i32
    %c0_68 = arith.constant 0 : index
    %207 = arith.index_cast %206 : i32 to index
    %c0_69 = arith.constant 0 : index
    %c0_70 = arith.constant 0 : index
    %208 = vector.load %arg2[%c0_68, %207, %c0_69, %c0_70] : memref<1x8x2x128xf32, #tpu.memory_space<vmem>>, vector<1x1x2x128xf32>
    %209 = vector.shape_cast %208 : vector<1x1x2x128xf32> to vector<2x128xf32>
    %cst_71 = arith.constant dense<0.000000e+00> : vector<2x128xf32>
    %210 = tpu.matmul %197, %4, %cst_71 {dimension_numbers = #tpu.dot_dimension_numbers<[1], [0], [0], [1], [0, 0, 1, 1], [], []>} : vector<2x32xf32>, vector<32x128xf32>, vector<2x128xf32> -> vector<2x128xf32>
    %211 = arith.addf %209, %210 : vector<2x128xf32>
    %212 = vector.extract_strided_slice %211 {offsets = [0, 0], sizes = [2, 32], strides = [1, 1]} : vector<2x128xf32> to vector<2x32xf32>
    %213 = arith.negf %212 : vector<2x32xf32>
    %214 = math.exp %213 : vector<2x32xf32>
    %cst_72 = arith.constant 1.000000e+00 : f32
    %215 = vector.broadcast %cst_72 : f32 to vector<2x32xf32>
    %216 = arith.addf %215, %214 : vector<2x32xf32>
    %217 = arith.divf %215, %216 : vector<2x32xf32>
    %218 = vector.extract_strided_slice %211 {offsets = [0, 32], sizes = [2, 32], strides = [1, 1]} : vector<2x128xf32> to vector<2x32xf32>
    %219 = arith.negf %218 : vector<2x32xf32>
    %220 = math.exp %219 : vector<2x32xf32>
    %cst_73 = arith.constant 1.000000e+00 : f32
    %221 = vector.broadcast %cst_73 : f32 to vector<2x32xf32>
    %222 = arith.addf %221, %220 : vector<2x32xf32>
    %223 = arith.divf %221, %222 : vector<2x32xf32>
    %224 = vector.extract_strided_slice %211 {offsets = [0, 64], sizes = [2, 32], strides = [1, 1]} : vector<2x128xf32> to vector<2x32xf32>
    %225 = math.tanh %224 : vector<2x32xf32>
    %226 = vector.extract_strided_slice %211 {offsets = [0, 96], sizes = [2, 32], strides = [1, 1]} : vector<2x128xf32> to vector<2x32xf32>
    %227 = arith.negf %226 : vector<2x32xf32>
    %228 = math.exp %227 : vector<2x32xf32>
    %cst_74 = arith.constant 1.000000e+00 : f32
    %229 = vector.broadcast %cst_74 : f32 to vector<2x32xf32>
    %230 = arith.addf %229, %228 : vector<2x32xf32>
    %231 = arith.divf %229, %230 : vector<2x32xf32>
    %232 = arith.mulf %223, %195 : vector<2x32xf32>
    %233 = arith.mulf %217, %225 : vector<2x32xf32>
    %234 = arith.addf %232, %233 : vector<2x32xf32>
    %235 = math.tanh %234 : vector<2x32xf32>
    %236 = arith.mulf %231, %235 : vector<2x32xf32>
    %c0_75 = arith.constant 0 : index
    %237 = arith.index_cast %206 : i32 to index
    %c0_76 = arith.constant 0 : index
    %c0_77 = arith.constant 0 : index
    %238 = vector.load %arg4[%c0_75, %237, %c0_76, %c0_77] : memref<1x8x2x32xf32, #tpu.memory_space<vmem>>, vector<1x1x2x32xf32>
    %239 = vector.shape_cast %238 : vector<1x1x2x32xf32> to vector<2x32xf32>
    %240 = vector.shape_cast %236 : vector<2x32xf32> to vector<1x1x2x32xf32>
    tpu.vector_store %arg4[%c0_75, %237, %c0_76, %c0_77], %240 {strides = array<i32>} : memref<1x8x2x32xf32, #tpu.memory_space<vmem>>, vector<1x1x2x32xf32>,
    %c6_i32 = arith.constant 6 : i32
    %c1_i32_78 = arith.constant 1 : i32
    %241 = arith.subi %c1_i32_78, %arg0 : i32
    %242 = arith.muli %241, %c6_i32 : i32
    %c7_i32_79 = arith.constant 7 : i32
    %243 = arith.subi %c7_i32_79, %c6_i32 : i32
    %244 = arith.muli %arg0, %243 : i32
    %245 = arith.addi %242, %244 : i32
    %c0_80 = arith.constant 0 : index
    %246 = arith.index_cast %245 : i32 to index
    %c0_81 = arith.constant 0 : index
    %c0_82 = arith.constant 0 : index
    %247 = vector.load %arg2[%c0_80, %246, %c0_81, %c0_82] : memref<1x8x2x128xf32, #tpu.memory_space<vmem>>, vector<1x1x2x128xf32>
    %248 = vector.shape_cast %247 : vector<1x1x2x128xf32> to vector<2x128xf32>
    %cst_83 = arith.constant dense<0.000000e+00> : vector<2x128xf32>
    %249 = tpu.matmul %236, %4, %cst_83 {dimension_numbers = #tpu.dot_dimension_numbers<[1], [0], [0], [1], [0, 0, 1, 1], [], []>} : vector<2x32xf32>, vector<32x128xf32>, vector<2x128xf32> -> vector<2x128xf32>
    %250 = arith.addf %248, %249 : vector<2x128xf32>
    %251 = vector.extract_strided_slice %250 {offsets = [0, 0], sizes = [2, 32], strides = [1, 1]} : vector<2x128xf32> to vector<2x32xf32>
    %252 = arith.negf %251 : vector<2x32xf32>
    %253 = math.exp %252 : vector<2x32xf32>
    %cst_84 = arith.constant 1.000000e+00 : f32
    %254 = vector.broadcast %cst_84 : f32 to vector<2x32xf32>
    %255 = arith.addf %254, %253 : vector<2x32xf32>
    %256 = arith.divf %254, %255 : vector<2x32xf32>
    %257 = vector.extract_strided_slice %250 {offsets = [0, 32], sizes = [2, 32], strides = [1, 1]} : vector<2x128xf32> to vector<2x32xf32>
    %258 = arith.negf %257 : vector<2x32xf32>
    %259 = math.exp %258 : vector<2x32xf32>
    %cst_85 = arith.constant 1.000000e+00 : f32
    %260 = vector.broadcast %cst_85 : f32 to vector<2x32xf32>
    %261 = arith.addf %260, %259 : vector<2x32xf32>
    %262 = arith.divf %260, %261 : vector<2x32xf32>
    %263 = vector.extract_strided_slice %250 {offsets = [0, 64], sizes = [2, 32], strides = [1, 1]} : vector<2x128xf32> to vector<2x32xf32>
    %264 = math.tanh %263 : vector<2x32xf32>
    %265 = vector.extract_strided_slice %250 {offsets = [0, 96], sizes = [2, 32], strides = [1, 1]} : vector<2x128xf32> to vector<2x32xf32>
    %266 = arith.negf %265 : vector<2x32xf32>
    %267 = math.exp %266 : vector<2x32xf32>
    %cst_86 = arith.constant 1.000000e+00 : f32
    %268 = vector.broadcast %cst_86 : f32 to vector<2x32xf32>
    %269 = arith.addf %268, %267 : vector<2x32xf32>
    %270 = arith.divf %268, %269 : vector<2x32xf32>
    %271 = arith.mulf %262, %234 : vector<2x32xf32>
    %272 = arith.mulf %256, %264 : vector<2x32xf32>
    %273 = arith.addf %271, %272 : vector<2x32xf32>
    %274 = math.tanh %273 : vector<2x32xf32>
    %275 = arith.mulf %270, %274 : vector<2x32xf32>
    %c0_87 = arith.constant 0 : index
    %276 = arith.index_cast %245 : i32 to index
    %c0_88 = arith.constant 0 : index
    %c0_89 = arith.constant 0 : index
    %277 = vector.load %arg4[%c0_87, %276, %c0_88, %c0_89] : memref<1x8x2x32xf32, #tpu.memory_space<vmem>>, vector<1x1x2x32xf32>
    %278 = vector.shape_cast %277 : vector<1x1x2x32xf32> to vector<2x32xf32>
    %279 = vector.shape_cast %275 : vector<2x32xf32> to vector<1x1x2x32xf32>
    tpu.vector_store %arg4[%c0_87, %276, %c0_88, %c0_89], %279 {strides = array<i32>} : memref<1x8x2x32xf32, #tpu.memory_space<vmem>>, vector<1x1x2x32xf32>,
    %c7_i32_90 = arith.constant 7 : i32
    %c1_i32_91 = arith.constant 1 : i32
    %280 = arith.subi %c1_i32_91, %arg0 : i32
    %281 = arith.muli %280, %c7_i32_90 : i32
    %c7_i32_92 = arith.constant 7 : i32
    %282 = arith.subi %c7_i32_92, %c7_i32_90 : i32
    %283 = arith.muli %arg0, %282 : i32
    %284 = arith.addi %281, %283 : i32
    %c0_93 = arith.constant 0 : index
    %285 = arith.index_cast %284 : i32 to index
    %c0_94 = arith.constant 0 : index
    %c0_95 = arith.constant 0 : index
    %286 = vector.load %arg2[%c0_93, %285, %c0_94, %c0_95] : memref<1x8x2x128xf32, #tpu.memory_space<vmem>>, vector<1x1x2x128xf32>
    %287 = vector.shape_cast %286 : vector<1x1x2x128xf32> to vector<2x128xf32>
    %cst_96 = arith.constant dense<0.000000e+00> : vector<2x128xf32>
    %288 = tpu.matmul %275, %4, %cst_96 {dimension_numbers = #tpu.dot_dimension_numbers<[1], [0], [0], [1], [0, 0, 1, 1], [], []>} : vector<2x32xf32>, vector<32x128xf32>, vector<2x128xf32> -> vector<2x128xf32>
    %289 = arith.addf %287, %288 : vector<2x128xf32>
    %290 = vector.extract_strided_slice %289 {offsets = [0, 0], sizes = [2, 32], strides = [1, 1]} : vector<2x128xf32> to vector<2x32xf32>
    %291 = arith.negf %290 : vector<2x32xf32>
    %292 = math.exp %291 : vector<2x32xf32>
    %cst_97 = arith.constant 1.000000e+00 : f32
    %293 = vector.broadcast %cst_97 : f32 to vector<2x32xf32>
    %294 = arith.addf %293, %292 : vector<2x32xf32>
    %295 = arith.divf %293, %294 : vector<2x32xf32>
    %296 = vector.extract_strided_slice %289 {offsets = [0, 32], sizes = [2, 32], strides = [1, 1]} : vector<2x128xf32> to vector<2x32xf32>
    %297 = arith.negf %296 : vector<2x32xf32>
    %298 = math.exp %297 : vector<2x32xf32>
    %cst_98 = arith.constant 1.000000e+00 : f32
    %299 = vector.broadcast %cst_98 : f32 to vector<2x32xf32>
    %300 = arith.addf %299, %298 : vector<2x32xf32>
    %301 = arith.divf %299, %300 : vector<2x32xf32>
    %302 = vector.extract_strided_slice %289 {offsets = [0, 64], sizes = [2, 32], strides = [1, 1]} : vector<2x128xf32> to vector<2x32xf32>
    %303 = math.tanh %302 : vector<2x32xf32>
    %304 = vector.extract_strided_slice %289 {offsets = [0, 96], sizes = [2, 32], strides = [1, 1]} : vector<2x128xf32> to vector<2x32xf32>
    %305 = arith.negf %304 : vector<2x32xf32>
    %306 = math.exp %305 : vector<2x32xf32>
    %cst_99 = arith.constant 1.000000e+00 : f32
    %307 = vector.broadcast %cst_99 : f32 to vector<2x32xf32>
    %308 = arith.addf %307, %306 : vector<2x32xf32>
    %309 = arith.divf %307, %308 : vector<2x32xf32>
    %310 = arith.mulf %301, %273 : vector<2x32xf32>
    %311 = arith.mulf %295, %303 : vector<2x32xf32>
    %312 = arith.addf %310, %311 : vector<2x32xf32>
    %313 = math.tanh %312 : vector<2x32xf32>
    %314 = arith.mulf %309, %313 : vector<2x32xf32>
    %c0_100 = arith.constant 0 : index
    %315 = arith.index_cast %284 : i32 to index
    %c0_101 = arith.constant 0 : index
    %c0_102 = arith.constant 0 : index
    %316 = vector.load %arg4[%c0_100, %315, %c0_101, %c0_102] : memref<1x8x2x32xf32, #tpu.memory_space<vmem>>, vector<1x1x2x32xf32>
    %317 = vector.shape_cast %316 : vector<1x1x2x32xf32> to vector<2x32xf32>
    %318 = vector.shape_cast %314 : vector<2x32xf32> to vector<1x1x2x32xf32>
    tpu.vector_store %arg4[%c0_100, %315, %c0_101, %c0_102], %318 {strides = array<i32>} : memref<1x8x2x32xf32, #tpu.memory_space<vmem>>, vector<1x1x2x32xf32>,
    %c8_i32 = arith.constant 8 : i32
    %c0_103 = arith.constant 0 : index
    %c0_104 = arith.constant 0 : index
    %319 = vector.load %arg6[%c0_103, %c0_104] : memref<2x32xf32, #tpu.memory_space<vmem>>, vector<2x32xf32>
    tpu.vector_store %arg6[%c0_103, %c0_104], %314 {strides = array<i32>} : memref<2x32xf32, #tpu.memory_space<vmem>>, vector<2x32xf32>,
    %c0_105 = arith.constant 0 : index
    %c0_106 = arith.constant 0 : index
    %320 = vector.load %arg7[%c0_105, %c0_106] : memref<2x32xf32, #tpu.memory_space<vmem>>, vector<2x32xf32>
    tpu.vector_store %arg7[%c0_105, %c0_106], %312 {strides = array<i32>} : memref<2x32xf32, #tpu.memory_space<vmem>>, vector<2x32xf32>,
    %c0_i32_107 = arith.constant 0 : i32
    %321 = arith.cmpi eq, %arg1, %c0_i32_107 : i32
    %322 = arith.extui %321 : i1 to i32
    %c0_i32_108 = arith.constant 0 : i32
    %323 = arith.cmpi ne, %322, %c0_i32_108 : i32
    scf.if %323 {
      %c0_109 = arith.constant 0 : index
      %c0_110 = arith.constant 0 : index
      %c0_111 = arith.constant 0 : index
      %324 = vector.load %arg5[%c0_109, %c0_110, %c0_111] : memref<1x2x32xf32, #tpu.memory_space<vmem>>, vector<1x2x32xf32>
      %325 = vector.shape_cast %324 : vector<1x2x32xf32> to vector<2x32xf32>
      %326 = vector.shape_cast %314 : vector<2x32xf32> to vector<1x2x32xf32>
      tpu.vector_store %arg5[%c0_109, %c0_110, %c0_111], %326 {strides = array<i32>} : memref<1x2x32xf32, #tpu.memory_space<vmem>>, vector<1x2x32xf32>,
    } else {
    }
    return
  }
  func.func @transform_0(%arg0: i32, %arg1: i32) -> (i32, i32, i32, i32) {
    %c1_i32 = arith.constant 1 : i32
    %0 = arith.subi %c1_i32, %arg0 : i32
    %1 = arith.muli %0, %arg1 : i32
    %c0_i32 = arith.constant 0 : i32
    %2 = arith.subi %c0_i32, %arg1 : i32
    %3 = arith.muli %arg0, %2 : i32
    %4 = arith.addi %1, %3 : i32
    %c0_i32_0 = arith.constant 0 : i32
    %c0_i32_1 = arith.constant 0 : i32
    %c0_i32_2 = arith.constant 0 : i32
    return %arg0, %4, %c0_i32_0, %c0_i32_1 : i32, i32, i32, i32
  }
  func.func @transform_1(%arg0: i32, %arg1: i32) -> (i32, i32, i32) {
    %c0_i32 = arith.constant 0 : i32
    %c0_i32_0 = arith.constant 0 : i32
    %c0_i32_1 = arith.constant 0 : i32
    return %arg0, %c0_i32, %c0_i32_0 : i32, i32, i32
  }
  func.func @transform_2(%arg0: i32, %arg1: i32) -> (i32, i32, i32, i32) {
    %c1_i32 = arith.constant 1 : i32
    %0 = arith.subi %c1_i32, %arg0 : i32
    %1 = arith.muli %0, %arg1 : i32
    %c0_i32 = arith.constant 0 : i32
    %2 = arith.subi %c0_i32, %arg1 : i32
    %3 = arith.muli %arg0, %2 : i32
    %4 = arith.addi %1, %3 : i32
    %c0_i32_0 = arith.constant 0 : i32
    %c0_i32_1 = arith.constant 0 : i32
    %c0_i32_2 = arith.constant 0 : i32
    return %arg0, %4, %c0_i32_0, %c0_i32_1 : i32, i32, i32, i32
  }
  func.func @transform_3(%arg0: i32, %arg1: i32) -> (i32, i32, i32) {
    %c0_i32 = arith.constant 0 : i32
    %c0_i32_0 = arith.constant 0 : i32
    %c0_i32_1 = arith.constant 0 : i32
    return %arg0, %c0_i32, %c0_i32_0 : i32, i32, i32
  }
}

module attributes {stable_mosaic.version = 11 : i64} {
  func.func @_bidir_lstm_chunk_kernel(%arg0: i32, %arg1: i32, %arg2: memref<1x8x2x128xf32, #tpu.memory_space<vmem>>, %arg3: memref<1x32x128xf32, #tpu.memory_space<vmem>>, %arg4: memref<1x8x2x32xf32, #tpu.memory_space<vmem>>, %arg5: memref<1x2x32xf32, #tpu.memory_space<vmem>>, %arg6: memref<2x32xf32, #tpu.memory_space<vmem>>, %arg7: memref<2x32xf32, #tpu.memory_space<vmem>>) attributes {dimension_semantics = [#tpu.dimension_semantics<parallel>, #tpu.dimension_semantics<arbitrary>], iteration_bounds = array<i64: 2, 1>, scalar_prefetch = 0 : i64, scratch_operands = 2 : i64, tpu.core_type = #tpu.core_type<tc>, window_params = [{transform_indices = @transform_0, window_bounds = array<i64: 1, 8, 2, 128>}, {transform_indices = @transform_1, window_bounds = array<i64: 1, 32, 128>}, {transform_indices = @transform_2, window_bounds = array<i64: 1, 8, 2, 32>}, {transform_indices = @transform_3, window_bounds = array<i64: 1, 2, 32>}]} {
    %c0_i32 = arith.constant 0 : i32
    %0 = arith.cmpi eq, %arg1, %c0_i32 : i32
    %1 = arith.extui %0 : i1 to i32
    %c0_i32_0 = arith.constant 0 : i32
    %2 = arith.cmpi ne, %1, %c0_i32_0 : i32
    scf.if %2 {
      %cst_109 = arith.constant 0.000000e+00 : f32
      %324 = vector.broadcast %cst_109 : f32 to vector<2x32xf32>
      %c0_110 = arith.constant 0 : index
      %c0_111 = arith.constant 0 : index
      %325 = vector.load %arg6[%c0_110, %c0_111] : memref<2x32xf32, #tpu.memory_space<vmem>>, vector<2x32xf32>
      tpu.vector_store %arg6[%c0_110, %c0_111], %324 {strides = array<i32>} : memref<2x32xf32, #tpu.memory_space<vmem>>, vector<2x32xf32>,
      %cst_112 = arith.constant 0.000000e+00 : f32
      %326 = vector.broadcast %cst_112 : f32 to vector<2x32xf32>
      %c0_113 = arith.constant 0 : index
      %c0_114 = arith.constant 0 : index
      %327 = vector.load %arg7[%c0_113, %c0_114] : memref<2x32xf32, #tpu.memory_space<vmem>>, vector<2x32xf32>
      tpu.vector_store %arg7[%c0_113, %c0_114], %326 {strides = array<i32>} : memref<2x32xf32, #tpu.memory_space<vmem>>, vector<2x32xf32>,
    } else {
    }
    %c0 = arith.constant 0 : index
    %c0_1 = arith.constant 0 : index
    %c0_2 = arith.constant 0 : index
    %3 = vector.load %arg3[%c0, %c0_1, %c0_2] : memref<1x32x128xf32, #tpu.memory_space<vmem>>, vector<1x32x128xf32>
    %4 = vector.shape_cast %3 : vector<1x32x128xf32> to vector<32x128xf32>
    %c0_3 = arith.constant 0 : index
    %c0_4 = arith.constant 0 : index
    %5 = vector.load %arg6[%c0_3, %c0_4] : memref<2x32xf32, #tpu.memory_space<vmem>>, vector<2x32xf32>
    %c0_5 = arith.constant 0 : index
    %c0_6 = arith.constant 0 : index
    %6 = vector.load %arg7[%c0_5, %c0_6] : memref<2x32xf32, #tpu.memory_space<vmem>>, vector<2x32xf32>
    %c0_i32_7 = arith.constant 0 : i32
    %c1_i32 = arith.constant 1 : i32
    %7 = arith.subi %c1_i32, %arg0 : i32
    %8 = arith.muli %7, %c0_i32_7 : i32
    %c7_i32 = arith.constant 7 : i32
    %9 = arith.subi %c7_i32, %c0_i32_7 : i32
    %10 = arith.muli %arg0, %9 : i32
    %11 = arith.addi %8, %10 : i32
    %c0_8 = arith.constant 0 : index
    %12 = arith.index_cast %11 : i32 to index
    %c0_9 = arith.constant 0 : index
    %c0_10 = arith.constant 0 : index
    %13 = vector.load %arg2[%c0_8, %12, %c0_9, %c0_10] : memref<1x8x2x128xf32, #tpu.memory_space<vmem>>, vector<1x1x2x128xf32>
    %14 = vector.shape_cast %13 : vector<1x1x2x128xf32> to vector<2x128xf32>
    %cst = arith.constant dense<0.000000e+00> : vector<2x128xf32>
    %15 = tpu.matmul %5, %4, %cst {dimension_numbers = #tpu.dot_dimension_numbers<[1], [0], [0], [1], [0, 0, 1, 1], [], []>} : vector<2x32xf32>, vector<32x128xf32>, vector<2x128xf32> -> vector<2x128xf32>
    %16 = arith.addf %14, %15 : vector<2x128xf32>
    %17 = vector.extract_strided_slice %16 {offsets = [0, 0], sizes = [2, 32], strides = [1, 1]} : vector<2x128xf32> to vector<2x32xf32>
    %18 = arith.negf %17 : vector<2x32xf32>
    %19 = math.exp %18 : vector<2x32xf32>
    %cst_11 = arith.constant 1.000000e+00 : f32
    %20 = vector.broadcast %cst_11 : f32 to vector<2x32xf32>
    %21 = arith.addf %20, %19 : vector<2x32xf32>
    %22 = arith.divf %20, %21 : vector<2x32xf32>
    %23 = vector.extract_strided_slice %16 {offsets = [0, 32], sizes = [2, 32], strides = [1, 1]} : vector<2x128xf32> to vector<2x32xf32>
    %24 = arith.negf %23 : vector<2x32xf32>
    %25 = math.exp %24 : vector<2x32xf32>
    %cst_12 = arith.constant 1.000000e+00 : f32
    %26 = vector.broadcast %cst_12 : f32 to vector<2x32xf32>
    %27 = arith.addf %26, %25 : vector<2x32xf32>
    %28 = arith.divf %26, %27 : vector<2x32xf32>
    %29 = vector.extract_strided_slice %16 {offsets = [0, 64], sizes = [2, 32], strides = [1, 1]} : vector<2x128xf32> to vector<2x32xf32>
    %30 = math.tanh %29 : vector<2x32xf32>
    %31 = vector.extract_strided_slice %16 {offsets = [0, 96], sizes = [2, 32], strides = [1, 1]} : vector<2x128xf32> to vector<2x32xf32>
    %32 = arith.negf %31 : vector<2x32xf32>
    %33 = math.exp %32 : vector<2x32xf32>
    %cst_13 = arith.constant 1.000000e+00 : f32
    %34 = vector.broadcast %cst_13 : f32 to vector<2x32xf32>
    %35 = arith.addf %34, %33 : vector<2x32xf32>
    %36 = arith.divf %34, %35 : vector<2x32xf32>
    %37 = arith.mulf %28, %6 : vector<2x32xf32>
    %38 = arith.mulf %22, %30 : vector<2x32xf32>
    %39 = arith.addf %37, %38 : vector<2x32xf32>
    %40 = math.tanh %39 : vector<2x32xf32>
    %41 = arith.mulf %36, %40 : vector<2x32xf32>
    %c0_14 = arith.constant 0 : index
    %42 = arith.index_cast %11 : i32 to index
    %c0_15 = arith.constant 0 : index
    %c0_16 = arith.constant 0 : index
    %43 = vector.load %arg4[%c0_14, %42, %c0_15, %c0_16] : memref<1x8x2x32xf32, #tpu.memory_space<vmem>>, vector<1x1x2x32xf32>
    %44 = vector.shape_cast %43 : vector<1x1x2x32xf32> to vector<2x32xf32>
    %45 = vector.shape_cast %41 : vector<2x32xf32> to vector<1x1x2x32xf32>
    tpu.vector_store %arg4[%c0_14, %42, %c0_15, %c0_16], %45 {strides = array<i32>} : memref<1x8x2x32xf32, #tpu.memory_space<vmem>>, vector<1x1x2x32xf32>,
    %c1_i32_17 = arith.constant 1 : i32
    %c1_i32_18 = arith.constant 1 : i32
    %46 = arith.subi %c1_i32_18, %arg0 : i32
    %47 = arith.muli %46, %c1_i32_17 : i32
    %c7_i32_19 = arith.constant 7 : i32
    %48 = arith.subi %c7_i32_19, %c1_i32_17 : i32
    %49 = arith.muli %arg0, %48 : i32
    %50 = arith.addi %47, %49 : i32
    %c0_20 = arith.constant 0 : index
    %51 = arith.index_cast %50 : i32 to index
    %c0_21 = arith.constant 0 : index
    %c0_22 = arith.constant 0 : index
    %52 = vector.load %arg2[%c0_20, %51, %c0_21, %c0_22] : memref<1x8x2x128xf32, #tpu.memory_space<vmem>>, vector<1x1x2x128xf32>
    %53 = vector.shape_cast %52 : vector<1x1x2x128xf32> to vector<2x128xf32>
    %cst_23 = arith.constant dense<0.000000e+00> : vector<2x128xf32>
    %54 = tpu.matmul %41, %4, %cst_23 {dimension_numbers = #tpu.dot_dimension_numbers<[1], [0], [0], [1], [0, 0, 1, 1], [], []>} : vector<2x32xf32>, vector<32x128xf32>, vector<2x128xf32> -> vector<2x128xf32>
    %55 = arith.addf %53, %54 : vector<2x128xf32>
    %56 = vector.extract_strided_slice %55 {offsets = [0, 0], sizes = [2, 32], strides = [1, 1]} : vector<2x128xf32> to vector<2x32xf32>
    %57 = arith.negf %56 : vector<2x32xf32>
    %58 = math.exp %57 : vector<2x32xf32>
    %cst_24 = arith.constant 1.000000e+00 : f32
    %59 = vector.broadcast %cst_24 : f32 to vector<2x32xf32>
    %60 = arith.addf %59, %58 : vector<2x32xf32>
    %61 = arith.divf %59, %60 : vector<2x32xf32>
    %62 = vector.extract_strided_slice %55 {offsets = [0, 32], sizes = [2, 32], strides = [1, 1]} : vector<2x128xf32> to vector<2x32xf32>
    %63 = arith.negf %62 : vector<2x32xf32>
    %64 = math.exp %63 : vector<2x32xf32>
    %cst_25 = arith.constant 1.000000e+00 : f32
    %65 = vector.broadcast %cst_25 : f32 to vector<2x32xf32>
    %66 = arith.addf %65, %64 : vector<2x32xf32>
    %67 = arith.divf %65, %66 : vector<2x32xf32>
    %68 = vector.extract_strided_slice %55 {offsets = [0, 64], sizes = [2, 32], strides = [1, 1]} : vector<2x128xf32> to vector<2x32xf32>
    %69 = math.tanh %68 : vector<2x32xf32>
    %70 = vector.extract_strided_slice %55 {offsets = [0, 96], sizes = [2, 32], strides = [1, 1]} : vector<2x128xf32> to vector<2x32xf32>
    %71 = arith.negf %70 : vector<2x32xf32>
    %72 = math.exp %71 : vector<2x32xf32>
    %cst_26 = arith.constant 1.000000e+00 : f32
    %73 = vector.broadcast %cst_26 : f32 to vector<2x32xf32>
    %74 = arith.addf %73, %72 : vector<2x32xf32>
    %75 = arith.divf %73, %74 : vector<2x32xf32>
    %76 = arith.mulf %67, %39 : vector<2x32xf32>
    %77 = arith.mulf %61, %69 : vector<2x32xf32>
    %78 = arith.addf %76, %77 : vector<2x32xf32>
    %79 = math.tanh %78 : vector<2x32xf32>
    %80 = arith.mulf %75, %79 : vector<2x32xf32>
    %c0_27 = arith.constant 0 : index
    %81 = arith.index_cast %50 : i32 to index
    %c0_28 = arith.constant 0 : index
    %c0_29 = arith.constant 0 : index
    %82 = vector.load %arg4[%c0_27, %81, %c0_28, %c0_29] : memref<1x8x2x32xf32, #tpu.memory_space<vmem>>, vector<1x1x2x32xf32>
    %83 = vector.shape_cast %82 : vector<1x1x2x32xf32> to vector<2x32xf32>
    %84 = vector.shape_cast %80 : vector<2x32xf32> to vector<1x1x2x32xf32>
    tpu.vector_store %arg4[%c0_27, %81, %c0_28, %c0_29], %84 {strides = array<i32>} : memref<1x8x2x32xf32, #tpu.memory_space<vmem>>, vector<1x1x2x32xf32>,
    %c2_i32 = arith.constant 2 : i32
    %c1_i32_30 = arith.constant 1 : i32
    %85 = arith.subi %c1_i32_30, %arg0 : i32
    %86 = arith.muli %85, %c2_i32 : i32
    %c7_i32_31 = arith.constant 7 : i32
    %87 = arith.subi %c7_i32_31, %c2_i32 : i32
    %88 = arith.muli %arg0, %87 : i32
    %89 = arith.addi %86, %88 : i32
    %c0_32 = arith.constant 0 : index
    %90 = arith.index_cast %89 : i32 to index
    %c0_33 = arith.constant 0 : index
    %c0_34 = arith.constant 0 : index
    %91 = vector.load %arg2[%c0_32, %90, %c0_33, %c0_34] : memref<1x8x2x128xf32, #tpu.memory_space<vmem>>, vector<1x1x2x128xf32>
    %92 = vector.shape_cast %91 : vector<1x1x2x128xf32> to vector<2x128xf32>
    %cst_35 = arith.constant dense<0.000000e+00> : vector<2x128xf32>
    %93 = tpu.matmul %80, %4, %cst_35 {dimension_numbers = #tpu.dot_dimension_numbers<[1], [0], [0], [1], [0, 0, 1, 1], [], []>} : vector<2x32xf32>, vector<32x128xf32>, vector<2x128xf32> -> vector<2x128xf32>
    %94 = arith.addf %92, %93 : vector<2x128xf32>
    %95 = vector.extract_strided_slice %94 {offsets = [0, 0], sizes = [2, 32], strides = [1, 1]} : vector<2x128xf32> to vector<2x32xf32>
    %96 = arith.negf %95 : vector<2x32xf32>
    %97 = math.exp %96 : vector<2x32xf32>
    %cst_36 = arith.constant 1.000000e+00 : f32
    %98 = vector.broadcast %cst_36 : f32 to vector<2x32xf32>
    %99 = arith.addf %98, %97 : vector<2x32xf32>
    %100 = arith.divf %98, %99 : vector<2x32xf32>
    %101 = vector.extract_strided_slice %94 {offsets = [0, 32], sizes = [2, 32], strides = [1, 1]} : vector<2x128xf32> to vector<2x32xf32>
    %102 = arith.negf %101 : vector<2x32xf32>
    %103 = math.exp %102 : vector<2x32xf32>
    %cst_37 = arith.constant 1.000000e+00 : f32
    %104 = vector.broadcast %cst_37 : f32 to vector<2x32xf32>
    %105 = arith.addf %104, %103 : vector<2x32xf32>
    %106 = arith.divf %104, %105 : vector<2x32xf32>
    %107 = vector.extract_strided_slice %94 {offsets = [0, 64], sizes = [2, 32], strides = [1, 1]} : vector<2x128xf32> to vector<2x32xf32>
    %108 = math.tanh %107 : vector<2x32xf32>
    %109 = vector.extract_strided_slice %94 {offsets = [0, 96], sizes = [2, 32], strides = [1, 1]} : vector<2x128xf32> to vector<2x32xf32>
    %110 = arith.negf %109 : vector<2x32xf32>
    %111 = math.exp %110 : vector<2x32xf32>
    %cst_38 = arith.constant 1.000000e+00 : f32
    %112 = vector.broadcast %cst_38 : f32 to vector<2x32xf32>
    %113 = arith.addf %112, %111 : vector<2x32xf32>
    %114 = arith.divf %112, %113 : vector<2x32xf32>
    %115 = arith.mulf %106, %78 : vector<2x32xf32>
    %116 = arith.mulf %100, %108 : vector<2x32xf32>
    %117 = arith.addf %115, %116 : vector<2x32xf32>
    %118 = math.tanh %117 : vector<2x32xf32>
    %119 = arith.mulf %114, %118 : vector<2x32xf32>
    %c0_39 = arith.constant 0 : index
    %120 = arith.index_cast %89 : i32 to index
    %c0_40 = arith.constant 0 : index
    %c0_41 = arith.constant 0 : index
    %121 = vector.load %arg4[%c0_39, %120, %c0_40, %c0_41] : memref<1x8x2x32xf32, #tpu.memory_space<vmem>>, vector<1x1x2x32xf32>
    %122 = vector.shape_cast %121 : vector<1x1x2x32xf32> to vector<2x32xf32>
    %123 = vector.shape_cast %119 : vector<2x32xf32> to vector<1x1x2x32xf32>
    tpu.vector_store %arg4[%c0_39, %120, %c0_40, %c0_41], %123 {strides = array<i32>} : memref<1x8x2x32xf32, #tpu.memory_space<vmem>>, vector<1x1x2x32xf32>,
    %c3_i32 = arith.constant 3 : i32
    %c1_i32_42 = arith.constant 1 : i32
    %124 = arith.subi %c1_i32_42, %arg0 : i32
    %125 = arith.muli %124, %c3_i32 : i32
    %c7_i32_43 = arith.constant 7 : i32
    %126 = arith.subi %c7_i32_43, %c3_i32 : i32
    %127 = arith.muli %arg0, %126 : i32
    %128 = arith.addi %125, %127 : i32
    %c0_44 = arith.constant 0 : index
    %129 = arith.index_cast %128 : i32 to index
    %c0_45 = arith.constant 0 : index
    %c0_46 = arith.constant 0 : index
    %130 = vector.load %arg2[%c0_44, %129, %c0_45, %c0_46] : memref<1x8x2x128xf32, #tpu.memory_space<vmem>>, vector<1x1x2x128xf32>
    %131 = vector.shape_cast %130 : vector<1x1x2x128xf32> to vector<2x128xf32>
    %cst_47 = arith.constant dense<0.000000e+00> : vector<2x128xf32>
    %132 = tpu.matmul %119, %4, %cst_47 {dimension_numbers = #tpu.dot_dimension_numbers<[1], [0], [0], [1], [0, 0, 1, 1], [], []>} : vector<2x32xf32>, vector<32x128xf32>, vector<2x128xf32> -> vector<2x128xf32>
    %133 = arith.addf %131, %132 : vector<2x128xf32>
    %134 = vector.extract_strided_slice %133 {offsets = [0, 0], sizes = [2, 32], strides = [1, 1]} : vector<2x128xf32> to vector<2x32xf32>
    %135 = arith.negf %134 : vector<2x32xf32>
    %136 = math.exp %135 : vector<2x32xf32>
    %cst_48 = arith.constant 1.000000e+00 : f32
    %137 = vector.broadcast %cst_48 : f32 to vector<2x32xf32>
    %138 = arith.addf %137, %136 : vector<2x32xf32>
    %139 = arith.divf %137, %138 : vector<2x32xf32>
    %140 = vector.extract_strided_slice %133 {offsets = [0, 32], sizes = [2, 32], strides = [1, 1]} : vector<2x128xf32> to vector<2x32xf32>
    %141 = arith.negf %140 : vector<2x32xf32>
    %142 = math.exp %141 : vector<2x32xf32>
    %cst_49 = arith.constant 1.000000e+00 : f32
    %143 = vector.broadcast %cst_49 : f32 to vector<2x32xf32>
    %144 = arith.addf %143, %142 : vector<2x32xf32>
    %145 = arith.divf %143, %144 : vector<2x32xf32>
    %146 = vector.extract_strided_slice %133 {offsets = [0, 64], sizes = [2, 32], strides = [1, 1]} : vector<2x128xf32> to vector<2x32xf32>
    %147 = math.tanh %146 : vector<2x32xf32>
    %148 = vector.extract_strided_slice %133 {offsets = [0, 96], sizes = [2, 32], strides = [1, 1]} : vector<2x128xf32> to vector<2x32xf32>
    %149 = arith.negf %148 : vector<2x32xf32>
    %150 = math.exp %149 : vector<2x32xf32>
    %cst_50 = arith.constant 1.000000e+00 : f32
    %151 = vector.broadcast %cst_50 : f32 to vector<2x32xf32>
    %152 = arith.addf %151, %150 : vector<2x32xf32>
    %153 = arith.divf %151, %152 : vector<2x32xf32>
    %154 = arith.mulf %145, %117 : vector<2x32xf32>
    %155 = arith.mulf %139, %147 : vector<2x32xf32>
    %156 = arith.addf %154, %155 : vector<2x32xf32>
    %157 = math.tanh %156 : vector<2x32xf32>
    %158 = arith.mulf %153, %157 : vector<2x32xf32>
    %c0_51 = arith.constant 0 : index
    %159 = arith.index_cast %128 : i32 to index
    %c0_52 = arith.constant 0 : index
    %c0_53 = arith.constant 0 : index
    %160 = vector.load %arg4[%c0_51, %159, %c0_52, %c0_53] : memref<1x8x2x32xf32, #tpu.memory_space<vmem>>, vector<1x1x2x32xf32>
    %161 = vector.shape_cast %160 : vector<1x1x2x32xf32> to vector<2x32xf32>
    %162 = vector.shape_cast %158 : vector<2x32xf32> to vector<1x1x2x32xf32>
    tpu.vector_store %arg4[%c0_51, %159, %c0_52, %c0_53], %162 {strides = array<i32>} : memref<1x8x2x32xf32, #tpu.memory_space<vmem>>, vector<1x1x2x32xf32>,
    %c4_i32 = arith.constant 4 : i32
    %c1_i32_54 = arith.constant 1 : i32
    %163 = arith.subi %c1_i32_54, %arg0 : i32
    %164 = arith.muli %163, %c4_i32 : i32
    %c7_i32_55 = arith.constant 7 : i32
    %165 = arith.subi %c7_i32_55, %c4_i32 : i32
    %166 = arith.muli %arg0, %165 : i32
    %167 = arith.addi %164, %166 : i32
    %c0_56 = arith.constant 0 : index
    %168 = arith.index_cast %167 : i32 to index
    %c0_57 = arith.constant 0 : index
    %c0_58 = arith.constant 0 : index
    %169 = vector.load %arg2[%c0_56, %168, %c0_57, %c0_58] : memref<1x8x2x128xf32, #tpu.memory_space<vmem>>, vector<1x1x2x128xf32>
    %170 = vector.shape_cast %169 : vector<1x1x2x128xf32> to vector<2x128xf32>
    %cst_59 = arith.constant dense<0.000000e+00> : vector<2x128xf32>
    %171 = tpu.matmul %158, %4, %cst_59 {dimension_numbers = #tpu.dot_dimension_numbers<[1], [0], [0], [1], [0, 0, 1, 1], [], []>} : vector<2x32xf32>, vector<32x128xf32>, vector<2x128xf32> -> vector<2x128xf32>
    %172 = arith.addf %170, %171 : vector<2x128xf32>
    %173 = vector.extract_strided_slice %172 {offsets = [0, 0], sizes = [2, 32], strides = [1, 1]} : vector<2x128xf32> to vector<2x32xf32>
    %174 = arith.negf %173 : vector<2x32xf32>
    %175 = math.exp %174 : vector<2x32xf32>
    %cst_60 = arith.constant 1.000000e+00 : f32
    %176 = vector.broadcast %cst_60 : f32 to vector<2x32xf32>
    %177 = arith.addf %176, %175 : vector<2x32xf32>
    %178 = arith.divf %176, %177 : vector<2x32xf32>
    %179 = vector.extract_strided_slice %172 {offsets = [0, 32], sizes = [2, 32], strides = [1, 1]} : vector<2x128xf32> to vector<2x32xf32>
    %180 = arith.negf %179 : vector<2x32xf32>
    %181 = math.exp %180 : vector<2x32xf32>
    %cst_61 = arith.constant 1.000000e+00 : f32
    %182 = vector.broadcast %cst_61 : f32 to vector<2x32xf32>
    %183 = arith.addf %182, %181 : vector<2x32xf32>
    %184 = arith.divf %182, %183 : vector<2x32xf32>
    %185 = vector.extract_strided_slice %172 {offsets = [0, 64], sizes = [2, 32], strides = [1, 1]} : vector<2x128xf32> to vector<2x32xf32>
    %186 = math.tanh %185 : vector<2x32xf32>
    %187 = vector.extract_strided_slice %172 {offsets = [0, 96], sizes = [2, 32], strides = [1, 1]} : vector<2x128xf32> to vector<2x32xf32>
    %188 = arith.negf %187 : vector<2x32xf32>
    %189 = math.exp %188 : vector<2x32xf32>
    %cst_62 = arith.constant 1.000000e+00 : f32
    %190 = vector.broadcast %cst_62 : f32 to vector<2x32xf32>
    %191 = arith.addf %190, %189 : vector<2x32xf32>
    %192 = arith.divf %190, %191 : vector<2x32xf32>
    %193 = arith.mulf %184, %156 : vector<2x32xf32>
    %194 = arith.mulf %178, %186 : vector<2x32xf32>
    %195 = arith.addf %193, %194 : vector<2x32xf32>
    %196 = math.tanh %195 : vector<2x32xf32>
    %197 = arith.mulf %192, %196 : vector<2x32xf32>
    %c0_63 = arith.constant 0 : index
    %198 = arith.index_cast %167 : i32 to index
    %c0_64 = arith.constant 0 : index
    %c0_65 = arith.constant 0 : index
    %199 = vector.load %arg4[%c0_63, %198, %c0_64, %c0_65] : memref<1x8x2x32xf32, #tpu.memory_space<vmem>>, vector<1x1x2x32xf32>
    %200 = vector.shape_cast %199 : vector<1x1x2x32xf32> to vector<2x32xf32>
    %201 = vector.shape_cast %197 : vector<2x32xf32> to vector<1x1x2x32xf32>
    tpu.vector_store %arg4[%c0_63, %198, %c0_64, %c0_65], %201 {strides = array<i32>} : memref<1x8x2x32xf32, #tpu.memory_space<vmem>>, vector<1x1x2x32xf32>,
    %c5_i32 = arith.constant 5 : i32
    %c1_i32_66 = arith.constant 1 : i32
    %202 = arith.subi %c1_i32_66, %arg0 : i32
    %203 = arith.muli %202, %c5_i32 : i32
    %c7_i32_67 = arith.constant 7 : i32
    %204 = arith.subi %c7_i32_67, %c5_i32 : i32
    %205 = arith.muli %arg0, %204 : i32
    %206 = arith.addi %203, %205 : i32
    %c0_68 = arith.constant 0 : index
    %207 = arith.index_cast %206 : i32 to index
    %c0_69 = arith.constant 0 : index
    %c0_70 = arith.constant 0 : index
    %208 = vector.load %arg2[%c0_68, %207, %c0_69, %c0_70] : memref<1x8x2x128xf32, #tpu.memory_space<vmem>>, vector<1x1x2x128xf32>
    %209 = vector.shape_cast %208 : vector<1x1x2x128xf32> to vector<2x128xf32>
    %cst_71 = arith.constant dense<0.000000e+00> : vector<2x128xf32>
    %210 = tpu.matmul %197, %4, %cst_71 {dimension_numbers = #tpu.dot_dimension_numbers<[1], [0], [0], [1], [0, 0, 1, 1], [], []>} : vector<2x32xf32>, vector<32x128xf32>, vector<2x128xf32> -> vector<2x128xf32>
    %211 = arith.addf %209, %210 : vector<2x128xf32>
    %212 = vector.extract_strided_slice %211 {offsets = [0, 0], sizes = [2, 32], strides = [1, 1]} : vector<2x128xf32> to vector<2x32xf32>
    %213 = arith.negf %212 : vector<2x32xf32>
    %214 = math.exp %213 : vector<2x32xf32>
    %cst_72 = arith.constant 1.000000e+00 : f32
    %215 = vector.broadcast %cst_72 : f32 to vector<2x32xf32>
    %216 = arith.addf %215, %214 : vector<2x32xf32>
    %217 = arith.divf %215, %216 : vector<2x32xf32>
    %218 = vector.extract_strided_slice %211 {offsets = [0, 32], sizes = [2, 32], strides = [1, 1]} : vector<2x128xf32> to vector<2x32xf32>
    %219 = arith.negf %218 : vector<2x32xf32>
    %220 = math.exp %219 : vector<2x32xf32>
    %cst_73 = arith.constant 1.000000e+00 : f32
    %221 = vector.broadcast %cst_73 : f32 to vector<2x32xf32>
    %222 = arith.addf %221, %220 : vector<2x32xf32>
    %223 = arith.divf %221, %222 : vector<2x32xf32>
    %224 = vector.extract_strided_slice %211 {offsets = [0, 64], sizes = [2, 32], strides = [1, 1]} : vector<2x128xf32> to vector<2x32xf32>
    %225 = math.tanh %224 : vector<2x32xf32>
    %226 = vector.extract_strided_slice %211 {offsets = [0, 96], sizes = [2, 32], strides = [1, 1]} : vector<2x128xf32> to vector<2x32xf32>
    %227 = arith.negf %226 : vector<2x32xf32>
    %228 = math.exp %227 : vector<2x32xf32>
    %cst_74 = arith.constant 1.000000e+00 : f32
    %229 = vector.broadcast %cst_74 : f32 to vector<2x32xf32>
    %230 = arith.addf %229, %228 : vector<2x32xf32>
    %231 = arith.divf %229, %230 : vector<2x32xf32>
    %232 = arith.mulf %223, %195 : vector<2x32xf32>
    %233 = arith.mulf %217, %225 : vector<2x32xf32>
    %234 = arith.addf %232, %233 : vector<2x32xf32>
    %235 = math.tanh %234 : vector<2x32xf32>
    %236 = arith.mulf %231, %235 : vector<2x32xf32>
    %c0_75 = arith.constant 0 : index
    %237 = arith.index_cast %206 : i32 to index
    %c0_76 = arith.constant 0 : index
    %c0_77 = arith.constant 0 : index
    %238 = vector.load %arg4[%c0_75, %237, %c0_76, %c0_77] : memref<1x8x2x32xf32, #tpu.memory_space<vmem>>, vector<1x1x2x32xf32>
    %239 = vector.shape_cast %238 : vector<1x1x2x32xf32> to vector<2x32xf32>
    %240 = vector.shape_cast %236 : vector<2x32xf32> to vector<1x1x2x32xf32>
    tpu.vector_store %arg4[%c0_75, %237, %c0_76, %c0_77], %240 {strides = array<i32>} : memref<1x8x2x32xf32, #tpu.memory_space<vmem>>, vector<1x1x2x32xf32>,
    %c6_i32 = arith.constant 6 : i32
    %c1_i32_78 = arith.constant 1 : i32
    %241 = arith.subi %c1_i32_78, %arg0 : i32
    %242 = arith.muli %241, %c6_i32 : i32
    %c7_i32_79 = arith.constant 7 : i32
    %243 = arith.subi %c7_i32_79, %c6_i32 : i32
    %244 = arith.muli %arg0, %243 : i32
    %245 = arith.addi %242, %244 : i32
    %c0_80 = arith.constant 0 : index
    %246 = arith.index_cast %245 : i32 to index
    %c0_81 = arith.constant 0 : index
    %c0_82 = arith.constant 0 : index
    %247 = vector.load %arg2[%c0_80, %246, %c0_81, %c0_82] : memref<1x8x2x128xf32, #tpu.memory_space<vmem>>, vector<1x1x2x128xf32>
    %248 = vector.shape_cast %247 : vector<1x1x2x128xf32> to vector<2x128xf32>
    %cst_83 = arith.constant dense<0.000000e+00> : vector<2x128xf32>
    %249 = tpu.matmul %236, %4, %cst_83 {dimension_numbers = #tpu.dot_dimension_numbers<[1], [0], [0], [1], [0, 0, 1, 1], [], []>} : vector<2x32xf32>, vector<32x128xf32>, vector<2x128xf32> -> vector<2x128xf32>
    %250 = arith.addf %248, %249 : vector<2x128xf32>
    %251 = vector.extract_strided_slice %250 {offsets = [0, 0], sizes = [2, 32], strides = [1, 1]} : vector<2x128xf32> to vector<2x32xf32>
    %252 = arith.negf %251 : vector<2x32xf32>
    %253 = math.exp %252 : vector<2x32xf32>
    %cst_84 = arith.constant 1.000000e+00 : f32
    %254 = vector.broadcast %cst_84 : f32 to vector<2x32xf32>
    %255 = arith.addf %254, %253 : vector<2x32xf32>
    %256 = arith.divf %254, %255 : vector<2x32xf32>
    %257 = vector.extract_strided_slice %250 {offsets = [0, 32], sizes = [2, 32], strides = [1, 1]} : vector<2x128xf32> to vector<2x32xf32>
    %258 = arith.negf %257 : vector<2x32xf32>
    %259 = math.exp %258 : vector<2x32xf32>
    %cst_85 = arith.constant 1.000000e+00 : f32
    %260 = vector.broadcast %cst_85 : f32 to vector<2x32xf32>
    %261 = arith.addf %260, %259 : vector<2x32xf32>
    %262 = arith.divf %260, %261 : vector<2x32xf32>
    %263 = vector.extract_strided_slice %250 {offsets = [0, 64], sizes = [2, 32], strides = [1, 1]} : vector<2x128xf32> to vector<2x32xf32>
    %264 = math.tanh %263 : vector<2x32xf32>
    %265 = vector.extract_strided_slice %250 {offsets = [0, 96], sizes = [2, 32], strides = [1, 1]} : vector<2x128xf32> to vector<2x32xf32>
    %266 = arith.negf %265 : vector<2x32xf32>
    %267 = math.exp %266 : vector<2x32xf32>
    %cst_86 = arith.constant 1.000000e+00 : f32
    %268 = vector.broadcast %cst_86 : f32 to vector<2x32xf32>
    %269 = arith.addf %268, %267 : vector<2x32xf32>
    %270 = arith.divf %268, %269 : vector<2x32xf32>
    %271 = arith.mulf %262, %234 : vector<2x32xf32>
    %272 = arith.mulf %256, %264 : vector<2x32xf32>
    %273 = arith.addf %271, %272 : vector<2x32xf32>
    %274 = math.tanh %273 : vector<2x32xf32>
    %275 = arith.mulf %270, %274 : vector<2x32xf32>
    %c0_87 = arith.constant 0 : index
    %276 = arith.index_cast %245 : i32 to index
    %c0_88 = arith.constant 0 : index
    %c0_89 = arith.constant 0 : index
    %277 = vector.load %arg4[%c0_87, %276, %c0_88, %c0_89] : memref<1x8x2x32xf32, #tpu.memory_space<vmem>>, vector<1x1x2x32xf32>
    %278 = vector.shape_cast %277 : vector<1x1x2x32xf32> to vector<2x32xf32>
    %279 = vector.shape_cast %275 : vector<2x32xf32> to vector<1x1x2x32xf32>
    tpu.vector_store %arg4[%c0_87, %276, %c0_88, %c0_89], %279 {strides = array<i32>} : memref<1x8x2x32xf32, #tpu.memory_space<vmem>>, vector<1x1x2x32xf32>,
    %c7_i32_90 = arith.constant 7 : i32
    %c1_i32_91 = arith.constant 1 : i32
    %280 = arith.subi %c1_i32_91, %arg0 : i32
    %281 = arith.muli %280, %c7_i32_90 : i32
    %c7_i32_92 = arith.constant 7 : i32
    %282 = arith.subi %c7_i32_92, %c7_i32_90 : i32
    %283 = arith.muli %arg0, %282 : i32
    %284 = arith.addi %281, %283 : i32
    %c0_93 = arith.constant 0 : index
    %285 = arith.index_cast %284 : i32 to index
    %c0_94 = arith.constant 0 : index
    %c0_95 = arith.constant 0 : index
    %286 = vector.load %arg2[%c0_93, %285, %c0_94, %c0_95] : memref<1x8x2x128xf32, #tpu.memory_space<vmem>>, vector<1x1x2x128xf32>
    %287 = vector.shape_cast %286 : vector<1x1x2x128xf32> to vector<2x128xf32>
    %cst_96 = arith.constant dense<0.000000e+00> : vector<2x128xf32>
    %288 = tpu.matmul %275, %4, %cst_96 {dimension_numbers = #tpu.dot_dimension_numbers<[1], [0], [0], [1], [0, 0, 1, 1], [], []>} : vector<2x32xf32>, vector<32x128xf32>, vector<2x128xf32> -> vector<2x128xf32>
    %289 = arith.addf %287, %288 : vector<2x128xf32>
    %290 = vector.extract_strided_slice %289 {offsets = [0, 0], sizes = [2, 32], strides = [1, 1]} : vector<2x128xf32> to vector<2x32xf32>
    %291 = arith.negf %290 : vector<2x32xf32>
    %292 = math.exp %291 : vector<2x32xf32>
    %cst_97 = arith.constant 1.000000e+00 : f32
    %293 = vector.broadcast %cst_97 : f32 to vector<2x32xf32>
    %294 = arith.addf %293, %292 : vector<2x32xf32>
    %295 = arith.divf %293, %294 : vector<2x32xf32>
    %296 = vector.extract_strided_slice %289 {offsets = [0, 32], sizes = [2, 32], strides = [1, 1]} : vector<2x128xf32> to vector<2x32xf32>
    %297 = arith.negf %296 : vector<2x32xf32>
    %298 = math.exp %297 : vector<2x32xf32>
    %cst_98 = arith.constant 1.000000e+00 : f32
    %299 = vector.broadcast %cst_98 : f32 to vector<2x32xf32>
    %300 = arith.addf %299, %298 : vector<2x32xf32>
    %301 = arith.divf %299, %300 : vector<2x32xf32>
    %302 = vector.extract_strided_slice %289 {offsets = [0, 64], sizes = [2, 32], strides = [1, 1]} : vector<2x128xf32> to vector<2x32xf32>
    %303 = math.tanh %302 : vector<2x32xf32>
    %304 = vector.extract_strided_slice %289 {offsets = [0, 96], sizes = [2, 32], strides = [1, 1]} : vector<2x128xf32> to vector<2x32xf32>
    %305 = arith.negf %304 : vector<2x32xf32>
    %306 = math.exp %305 : vector<2x32xf32>
    %cst_99 = arith.constant 1.000000e+00 : f32
    %307 = vector.broadcast %cst_99 : f32 to vector<2x32xf32>
    %308 = arith.addf %307, %306 : vector<2x32xf32>
    %309 = arith.divf %307, %308 : vector<2x32xf32>
    %310 = arith.mulf %301, %273 : vector<2x32xf32>
    %311 = arith.mulf %295, %303 : vector<2x32xf32>
    %312 = arith.addf %310, %311 : vector<2x32xf32>
    %313 = math.tanh %312 : vector<2x32xf32>
    %314 = arith.mulf %309, %313 : vector<2x32xf32>
    %c0_100 = arith.constant 0 : index
    %315 = arith.index_cast %284 : i32 to index
    %c0_101 = arith.constant 0 : index
    %c0_102 = arith.constant 0 : index
    %316 = vector.load %arg4[%c0_100, %315, %c0_101, %c0_102] : memref<1x8x2x32xf32, #tpu.memory_space<vmem>>, vector<1x1x2x32xf32>
    %317 = vector.shape_cast %316 : vector<1x1x2x32xf32> to vector<2x32xf32>
    %318 = vector.shape_cast %314 : vector<2x32xf32> to vector<1x1x2x32xf32>
    tpu.vector_store %arg4[%c0_100, %315, %c0_101, %c0_102], %318 {strides = array<i32>} : memref<1x8x2x32xf32, #tpu.memory_space<vmem>>, vector<1x1x2x32xf32>,
    %c8_i32 = arith.constant 8 : i32
    %c0_103 = arith.constant 0 : index
    %c0_104 = arith.constant 0 : index
    %319 = vector.load %arg6[%c0_103, %c0_104] : memref<2x32xf32, #tpu.memory_space<vmem>>, vector<2x32xf32>
    tpu.vector_store %arg6[%c0_103, %c0_104], %314 {strides = array<i32>} : memref<2x32xf32, #tpu.memory_space<vmem>>, vector<2x32xf32>,
    %c0_105 = arith.constant 0 : index
    %c0_106 = arith.constant 0 : index
    %320 = vector.load %arg7[%c0_105, %c0_106] : memref<2x32xf32, #tpu.memory_space<vmem>>, vector<2x32xf32>
    tpu.vector_store %arg7[%c0_105, %c0_106], %312 {strides = array<i32>} : memref<2x32xf32, #tpu.memory_space<vmem>>, vector<2x32xf32>,
    %c0_i32_107 = arith.constant 0 : i32
    %321 = arith.cmpi eq, %arg1, %c0_i32_107 : i32
    %322 = arith.extui %321 : i1 to i32
    %c0_i32_108 = arith.constant 0 : i32
    %323 = arith.cmpi ne, %322, %c0_i32_108 : i32
    scf.if %323 {
      %c0_109 = arith.constant 0 : index
      %c0_110 = arith.constant 0 : index
      %c0_111 = arith.constant 0 : index
      %324 = vector.load %arg5[%c0_109, %c0_110, %c0_111] : memref<1x2x32xf32, #tpu.memory_space<vmem>>, vector<1x2x32xf32>
      %325 = vector.shape_cast %324 : vector<1x2x32xf32> to vector<2x32xf32>
      %326 = vector.shape_cast %314 : vector<2x32xf32> to vector<1x2x32xf32>
      tpu.vector_store %arg5[%c0_109, %c0_110, %c0_111], %326 {strides = array<i32>} : memref<1x2x32xf32, #tpu.memory_space<vmem>>, vector<1x2x32xf32>,
    } else {
    }
    return
  }
  func.func @transform_0(%arg0: i32, %arg1: i32) -> (i32, i32, i32, i32) {
    %c1_i32 = arith.constant 1 : i32
    %0 = arith.subi %c1_i32, %arg0 : i32
    %1 = arith.muli %0, %arg1 : i32
    %c0_i32 = arith.constant 0 : i32
    %2 = arith.subi %c0_i32, %arg1 : i32
    %3 = arith.muli %arg0, %2 : i32
    %4 = arith.addi %1, %3 : i32
    %c0_i32_0 = arith.constant 0 : i32
    %c0_i32_1 = arith.constant 0 : i32
    %c0_i32_2 = arith.constant 0 : i32
    return %arg0, %4, %c0_i32_0, %c0_i32_1 : i32, i32, i32, i32
  }
  func.func @transform_1(%arg0: i32, %arg1: i32) -> (i32, i32, i32) {
    %c0_i32 = arith.constant 0 : i32
    %c0_i32_0 = arith.constant 0 : i32
    %c0_i32_1 = arith.constant 0 : i32
    return %arg0, %c0_i32, %c0_i32_0 : i32, i32, i32
  }
  func.func @transform_2(%arg0: i32, %arg1: i32) -> (i32, i32, i32, i32) {
    %c1_i32 = arith.constant 1 : i32
    %0 = arith.subi %c1_i32, %arg0 : i32
    %1 = arith.muli %0, %arg1 : i32
    %c0_i32 = arith.constant 0 : i32
    %2 = arith.subi %c0_i32, %arg1 : i32
    %3 = arith.muli %arg0, %2 : i32
    %4 = arith.addi %1, %3 : i32
    %c0_i32_0 = arith.constant 0 : i32
    %c0_i32_1 = arith.constant 0 : i32
    %c0_i32_2 = arith.constant 0 : i32
    return %arg0, %4, %c0_i32_0, %c0_i32_1 : i32, i32, i32, i32
  }
  func.func @transform_3(%arg0: i32, %arg1: i32) -> (i32, i32, i32) {
    %c0_i32 = arith.constant 0 : i32
    %c0_i32_0 = arith.constant 0 : i32
    %c0_i32_1 = arith.constant 0 : i32
    return %arg0, %c0_i32, %c0_i32_0 : i32, i32, i32
  }
}

</mosaic_0001>

<llo_original>
// kernel: lstm_feature_extractor.2
$region0: #{lstm_feature_extractor.2}
  #allocation0 [shape = 'u32[]', space=smem, size = 0x4, offset = 0x4, fixed_abs, tag = 'smem constant byte address 0x4 - core index']
  #allocation1 [shape = 'u32[72,128]{1,0:T(1,128)}', space=vmem, size = 0x9000, scoped, tag = 'internal scratch']
  #allocation2 [shape = 'f32[2,32]{1,0:T(2,128)}', space=vmem, size = 0x400, scoped, tag = 'scratch operand']
  #allocation3 [shape = 'f32[2,32]{1,0:T(2,128)}', space=vmem, size = 0x400, scoped, tag = 'scratch operand']
  %s0 = inlined_call_operand.vmem [shape: f32[2,8,2,128], index: 0, kind: input, shape index: {}]
  %s1 = inlined_call_operand.vmem [shape: f32[2,32,128], index: 1, kind: input, shape index: {}]
  %s2 = inlined_call_operand.vmem [shape: f32[2,8,2,32], index: 2, kind: output, shape index: {0}]
  %s3 = inlined_call_operand.vmem [shape: f32[2,2,32], index: 3, kind: output, shape index: {1}]
  %4 = xla_tuple %s2, %s3
  %s5 = sld [smem:[#allocation0]]
  $region57: #{lstm_feature_extractor.2} parent=0
    _
  %s7 = ssub.s32 1, %s5
  %s8 = scalar_select 0, %s7, %s5
  loop: start=0, step=1, limit=4
  $region2: #{lstm_feature_extractor.2} parent=0 // loop_pre_header
    _
  $region3: #{lstm_feature_extractor.2} parent=0 // loop_header
    %s10 = sphi 0, %s14
    %p11 = scmp.ge.s32.totalorder %s10, 4
    %s17 = sphi 0, %s29
    %s18 = sphi 0, %s25
    %s19 = sphi 0, %s17
    %s20 = sphi 0, %s18
    %s21 = sphi 0, %s19
    %s22 = sphi 0, %s20
    %s44 = sphi 0, %s46
    %s47 = sphi 0, %s44
    %s48 = sphi 0, %s47
    %s64 = sphi 0, %s48
    %s70 = sphi 0, %s72
    %s73 = sphi 0, %s70
    %s74 = sphi 0, %s73
    %s90 = sphi 0, %s74
    %s108 = sphi 0, %s110
    %s111 = sphi 0, %s108
    %s112 = sphi 0, %s111
    %s128 = sphi 0, %s112
    %s134 = sphi 0, %s136
    %s137 = sphi 0, %s134
    %s138 = sphi 0, %s137
    %s154 = sphi 0, %s138
  $region4: #{lstm_feature_extractor.2} parent=0 // loop_header_branch
    %13 = sbr.rel (%p11) target = $region8
  $region5: #{lstm_feature_extractor.2} parent=0 // loop_body
    %s15 = ssub.s32 %s10, 1
    %s16 = ssub.s32 %s10, 2
    %s23 = sadd.s32 1, %s18
    %p24 = scmp.ge.s32.totalorder %s23, 1
    %s25 = scalar_select %p24, 0, %s23
    %s26 = sadd.s32 1, %s17
    %s27 = scalar_select %p24, %s26, %s17
    %p28 = scmp.ge.s32.totalorder %s27, 2
    %s29 = scalar_select %p28, 0, %s27
    %s30 = ssub.s32 1, %s17
    %s31 = smul.u32 %s30, %s18
    %s32 = ssub.s32 0, %s18
    %s33 = smul.u32 %s17, %s32
    %s34 = sadd.s32 %s31, %s33
    %s35 = ssub.s32 1, %s29
    %s36 = smul.u32 %s35, %s25
    %s37 = ssub.s32 0, %s25
    %s38 = smul.u32 %s29, %s37
    %s39 = sadd.s32 %s36, %s38
    %s40 = ssub.s32 %s17, %s29
    %s41 = ssub.s32 %s34, %s39
    %s42 = sor.u32 %s40, %s41
    %p43 = scmp.eq.s32.totalorder %s42, 0
    %s45 = sadd.s32 %s44, 1
    %s46 = scalar_select %p43, %s44, %s45
    %p49 = pneg %p43
    %p50 = scmp.eq.s32.totalorder %s10, 1
    %p51 = por %p49, %p50
    %p52 = scmp.ne.s32.totalorder %s44, %s47
    %p53 = scmp.eq.s32.totalorder %s10, 0
    %p54 = por %p52, %p53
    %p55 = scmp.ne.s32.totalorder %s44, %s47
    %p56 = scmp.eq.s32.totalorder %s15, 1
    %p57 = por %p55, %p56
    %p58 = scmp.ne.s32.totalorder %s47, %s48
    %p59 = scmp.eq.s32.totalorder %s15, 0
    %p60 = por %p58, %p59
    %p61 = scmp.ne.s32.totalorder %s47, %s48
    %p62 = scmp.eq.s32.totalorder %s16, 1
    %p63 = por %p61, %p62
    %p65 = scmp.ne.s32.totalorder %s48, %s64
    %p66 = scmp.eq.s32.totalorder %s16, 0
    %p67 = por %p65, %p66
    %s68 = ssub.s32 %s17, %s29
    %p69 = scmp.eq.s32.totalorder %s68, 0
    %s71 = sadd.s32 %s70, 1
    %s72 = scalar_select %p69, %s70, %s71
    %p75 = pneg %p69
    %p76 = scmp.eq.s32.totalorder %s10, 1
    %p77 = por %p75, %p76
    %p78 = scmp.ne.s32.totalorder %s70, %s73
    %p79 = scmp.eq.s32.totalorder %s10, 0
    %p80 = por %p78, %p79
    %p81 = scmp.ne.s32.totalorder %s70, %s73
    %p82 = scmp.eq.s32.totalorder %s15, 1
    %p83 = por %p81, %p82
    %p84 = scmp.ne.s32.totalorder %s73, %s74
    %p85 = scmp.eq.s32.totalorder %s15, 0
    %p86 = por %p84, %p85
    %p87 = scmp.ne.s32.totalorder %s73, %s74
    %p88 = scmp.eq.s32.totalorder %s16, 1
    %p89 = por %p87, %p88
    %p91 = scmp.ne.s32.totalorder %s74, %s90
    %p92 = scmp.eq.s32.totalorder %s16, 0
    %p93 = por %p91, %p92
    %s94 = ssub.s32 1, %s17
    %s95 = smul.u32 %s94, %s18
    %s96 = ssub.s32 0, %s18
    %s97 = smul.u32 %s17, %s96
    %s98 = sadd.s32 %s95, %s97
    %s99 = ssub.s32 1, %s29
    %s100 = smul.u32 %s99, %s25
    %s101 = ssub.s32 0, %s25
    %s102 = smul.u32 %s29, %s101
    %s103 = sadd.s32 %s100, %s102
    %s104 = ssub.s32 %s17, %s29
    %s105 = ssub.s32 %s98, %s103
    %s106 = sor.u32 %s104, %s105
    %p107 = scmp.eq.s32.totalorder %s106, 0
    %s109 = sadd.s32 %s108, 1
    %s110 = scalar_select %p107, %s108, %s109
    %p113 = pneg %p107
    %p114 = scmp.eq.s32.totalorder %s10, 1
    %p115 = por %p113, %p114
    %p116 = scmp.ne.s32.totalorder %s108, %s111
    %p117 = scmp.eq.s32.totalorder %s10, 0
    %p118 = por %p116, %p117
    %p119 = scmp.ne.s32.totalorder %s108, %s111
    %p120 = scmp.eq.s32.totalorder %s15, 1
    %p121 = por %p119, %p120
    %p122 = scmp.ne.s32.totalorder %s111, %s112
    %p123 = scmp.eq.s32.totalorder %s15, 0
    %p124 = por %p122, %p123
    %p125 = scmp.ne.s32.totalorder %s111, %s112
    %p126 = scmp.eq.s32.totalorder %s16, 1
    %p127 = por %p125, %p126
    %p129 = scmp.ne.s32.totalorder %s112, %s128
    %p130 = scmp.eq.s32.totalorder %s16, 0
    %p131 = por %p129, %p130
    %s132 = ssub.s32 %s17, %s29
    %p133 = scmp.eq.s32.totalorder %s132, 0
    %s135 = sadd.s32 %s134, 1
    %s136 = scalar_select %p133, %s134, %s135
    %p139 = pneg %p133
    %p140 = scmp.eq.s32.totalorder %s10, 1
    %p141 = por %p139, %p140
    %p142 = scmp.ne.s32.totalorder %s134, %s137
    %p143 = scmp.eq.s32.totalorder %s10, 0
    %p144 = por %p142, %p143
    %p145 = scmp.ne.s32.totalorder %s134, %s137
    %p146 = scmp.eq.s32.totalorder %s15, 1
    %p147 = por %p145, %p146
    %p148 = scmp.ne.s32.totalorder %s137, %s138
    %p149 = scmp.eq.s32.totalorder %s15, 0
    %p150 = por %p148, %p149
    %p151 = scmp.ne.s32.totalorder %s137, %s138
    %p152 = scmp.eq.s32.totalorder %s16, 1
    %p153 = por %p151, %p152
    %p155 = scmp.ne.s32.totalorder %s138, %s154
    %p156 = scmp.eq.s32.totalorder %s16, 0
    %p157 = por %p155, %p156
    %p158 = scmp.le.s32.totalorder 1, %s10
    %p159 = scmp.lt.s32.totalorder %s10, 3
    %p160 = pnand %p158, %p159
    %p161 = pneg %p160
    // Predicated region
    $region9: #{lstm_feature_extractor.2} parent=5 // pred_check
      _
    $region10: #{lstm_feature_extractor.2} parent=5 // pred_check_branch
      %163 = sbr.rel (%p160) target = $region12
    $region11: #{lstm_feature_extractor.2} parent=5 // pred_region
      %s164 = ssub.s32 %s10, 1
    $region12: #{lstm_feature_extractor.2} parent=5 // pred_fallthru
      _
    %p165 = scmp.lt.s32.totalorder %s10, 2
    // Predicated region
    $region13: #{lstm_feature_extractor.2} parent=5 // pred_check
      %p166 = pneg %p165
    $region14: #{lstm_feature_extractor.2} parent=5 // pred_check_branch
      %168 = sbr.rel (%p166) target = $region16
    $region15: #{lstm_feature_extractor.2} parent=5 // pred_region
      // Predicated region
      $region17: #{lstm_feature_extractor.2} parent=15 // pred_check
        %p169 = pneg %p54
      $region18: #{lstm_feature_extractor.2} parent=15 // pred_check_branch
        %171 = sbr.rel (%p169) target = $region20
      $region19: #{lstm_feature_extractor.2} parent=15 // pred_region
        %s172 = ssub.s32 1, %s17
        %s173 = smul.u32 %s172, %s18
        %s174 = ssub.s32 0, %s18
        %s175 = smul.u32 %s17, %s174
        %s176 = sadd.s32 %s173, %s175
        %s177 = smul.u32 8, %s176
        %p178 = scmp.lt.s32.totalorder %s17, 1
        %s179 = scalar_select %p178, %s17, 1
        %p180 = scmp.lt.s32.totalorder %s177, 7
        %s181 = scalar_select %p180, %s177, 7
        %s182 = smul.addr %s179, 8
        %s183 = sadd.s32 %s181, %s182
        %s184 = smul.addr %s183, 2
        %s185 = scalar_lea.vmem %s0, %s184
        %s186 = ssub.s32 1, %s17
        %s187 = smul.u32 %s186, %s18
        %s188 = ssub.s32 0, %s18
        %s189 = smul.u32 %s17, %s188
        %s190 = sadd.s32 %s187, %s189
        %s191 = smul.u32 8, %s190
      $region20: #{lstm_feature_extractor.2} parent=15 // pred_fallthru
        _
      // Predicated region
      $region21: #{lstm_feature_extractor.2} parent=15 // pred_check
        %p192 = pneg %p80
      $region22: #{lstm_feature_extractor.2} parent=15 // pred_check_branch
        %194 = sbr.rel (%p192) target = $region24
      $region23: #{lstm_feature_extractor.2} parent=15 // pred_region
        %p195 = scmp.lt.s32.totalorder %s17, 1
        %s196 = scalar_select %p195, %s17, 1
        %s197 = smul.addr %s196, 4
        %s198 = smul.addr %s197, 8
        %s199 = scalar_lea.vmem %s1, %s198
      $region24: #{lstm_feature_extractor.2} parent=15 // pred_fallthru
        _
    $region16: #{lstm_feature_extractor.2} parent=5 // pred_fallthru
      _
    %p200 = scmp.le.s32.totalorder 1, %s10
    %p201 = scmp.lt.s32.totalorder %s10, 3
    %p202 = pnand %p200, %p201
    %p203 = pneg %p202
    // Predicated region
    $region25: #{lstm_feature_extractor.2} parent=5 // pred_check
      _
    $region26: #{lstm_feature_extractor.2} parent=5 // pred_check_branch
      %205 = sbr.rel (%p202) target = $region28
    $region27: #{lstm_feature_extractor.2} parent=5 // pred_region
      %s206 = ssub.s32 %s10, 1
      %s207 = ssub.s32 1, %s19
      %s208 = smul.u32 %s207, %s20
      %s209 = ssub.s32 0, %s20
      %s210 = smul.u32 %s19, %s209
      %s211 = sadd.s32 %s208, %s210
      %s212 = smul.u32 8, %s211
      %p213 = scmp.lt.s32.totalorder %s19, 1
      %s214 = scalar_select %p213, %s19, 1
      %p215 = scmp.lt.s32.totalorder %s212, 7
      %s216 = scalar_select %p215, %s212, 7
      %s217 = smul.addr %s214, 8
      %s218 = sadd.s32 %s216, %s217
      %s219 = smul.addr %s218, 2
      %s220 = scalar_lea.vmem %s0, %s219
      %p221 = pneg %p60
      %p222 = pneg %p57
      %p223 = scmp.lt.s32.totalorder %s19, 1
      %s224 = scalar_select %p223, %s19, 1
      %s225 = smul.addr %s224, 4
      %s226 = smul.addr %s225, 8
      %s227 = scalar_lea.vmem %s1, %s226
      %p228 = pneg %p86
      %p229 = pneg %p83
      %p230 = pneg %p124
      %p231 = pneg %p121
      %s232 = ssub.s32 1, %s19
      %s233 = smul.u32 %s232, %s20
      %s234 = ssub.s32 0, %s20
      %s235 = smul.u32 %s19, %s234
      %s236 = sadd.s32 %s233, %s235
      %s237 = smul.u32 8, %s236
      %p238 = scmp.lt.s32.totalorder %s19, 1
      %s239 = scalar_select %p238, %s19, 1
      %p240 = scmp.lt.s32.totalorder %s237, 7
      %s241 = scalar_select %p240, %s237, 7
      %s242 = smul.addr %s239, 8
      %s243 = sadd.s32 %s241, %s242
      %s244 = smul.addr %s243, 2
      %s245 = scalar_lea.vmem %s2, %s244
      %p246 = pneg %p150
      %p247 = pneg %p147
      %p248 = scmp.lt.s32.totalorder %s19, 1
      %s249 = scalar_select %p248, %s19, 1
      %s250 = smul.addr %s249, 2
      %s251 = scalar_lea.vmem %s3, %s250
      %s252 = ssub.s32 1, %s19
      %s253 = smul.u32 %s252, %s20
      %s254 = ssub.s32 0, %s20
      %s255 = smul.u32 %s19, %s254
      %s256 = sadd.s32 %s253, %s255
      %s257 = smul.u32 8, %s256
      %p258 = scmp.lt.s32.totalorder %s19, 1
      %s259 = scalar_select %p258, %s19, 1
      %p260 = scmp.lt.s32.totalorder %s257, 7
      %s261 = scalar_select %p260, %s257, 7
      %s262 = smul.addr %s259, 8
      %s263 = sadd.s32 %s261, %s262
      %s264 = smul.addr %s263, 2
      %s265 = scalar_lea.vmem %s0, %s264
      %s266 = ssub.s32 1, %s19
      %s267 = smul.u32 %s266, %s20
      %s268 = ssub.s32 0, %s20
      %s269 = smul.u32 %s19, %s268
      %s270 = sadd.s32 %s267, %s269
      %s271 = smul.u32 8, %s270
      %p272 = scmp.lt.s32.totalorder %s19, 1
      %s273 = scalar_select %p272, %s19, 1
      %s274 = smul.addr %s273, 4
      %s275 = smul.addr %s274, 8
      %s276 = scalar_lea.vmem %s1, %s275
      %s277 = ssub.s32 1, %s19
      %s278 = smul.u32 %s277, %s20
      %s279 = ssub.s32 0, %s20
      %s280 = smul.u32 %s19, %s279
      %s281 = sadd.s32 %s278, %s280
      %s282 = smul.u32 8, %s281
      %p283 = scmp.lt.s32.totalorder %s19, 1
      %s284 = scalar_select %p283, %s19, 1
      %p285 = scmp.lt.s32.totalorder %s282, 7
      %s286 = scalar_select %p285, %s282, 7
      %s287 = smul.addr %s284, 8
      %s288 = sadd.s32 %s286, %s287
      %s289 = smul.addr %s288, 2
      %s290 = scalar_lea.vmem %s2, %s289
      %s291 = ssub.s32 1, %s19
      %s292 = smul.u32 %s291, %s20
      %s293 = ssub.s32 0, %s20
      %s294 = smul.u32 %s19, %s293
      %s295 = sadd.s32 %s292, %s294
      %s296 = smul.u32 8, %s295
      %p297 = scmp.lt.s32.totalorder %s19, 1
      %s298 = scalar_select %p297, %s19, 1
      %s299 = smul.addr %s298, 2
      %s300 = scalar_lea.vmem %s3, %s299
      %p301 = scmp.eq.s32.totalorder %s20, 0
      // Predicated region
      $region29: #{lstm_feature_extractor.2} parent=27 // pred_check
        %p302 = pneg %p301
      $region30: #{lstm_feature_extractor.2} parent=27 // pred_check_branch
        %304 = sbr.rel (%p302) target = $region32
      $region31: #{lstm_feature_extractor.2} parent=27 // pred_region
        %vm305 = vcmask 254976
        %306 = vst.msk [vmem:[#allocation2] sm:$0x3] %vm305, 0.0
        %307 = vst.msk [vmem:[#allocation3] sm:$0x3] %vm305, 0.0
      $region32: #{lstm_feature_extractor.2} parent=27 // pred_fallthru
        _
      %v308 = vld [vmem:[%s276] sm:$0xff]
      %v309 = vld [vmem:[%s276 + $0x8] sm:$0xff]
      %v310 = vld [vmem:[%s276 + $0x10] sm:$0xff]
      %v311 = vld [vmem:[%s276 + $0x18] sm:$0xff]
      %v312 = vld [vmem:[#allocation2] sm:$0x3]
      %v313 = vld [vmem:[#allocation3] sm:$0x3]
      %s314 = smul.u32 %s19, 7
      %s315 = smul.u32 %s314, 2
      %s316 = scalar_lea.vmem %s265, %s315
      %v317 = vld [vmem:[%s316] sm:$0x3]
      %vm318 = vcmask 261120
      %v320 = vsel %vm318, %v312, 0
      %322 = vmatpush.msra.mxu0 0.0
      %323 = vmatpush.msra.mxu0 0.0
      %324 = vmatpush.msra.mxu0 0.0
      %325 = vmatpush.msra.mxu0 0.0
      %326 = vmatpush.msra.mxu0 0.0
      %327 = vmatpush.msra.mxu0 0.0
      %328 = vmatpush.msra.mxu0 0.0
      %329 = vmatpush.msra.mxu0 0.0
      %330 = vmatpush.msra.mxu0 0.0
      %331 = vmatpush.msra.mxu0 0.0
      %332 = vmatpush.msra.mxu0 0.0
      %333 = vmatpush.msra.mxu0 0.0
      %334 = vmatpush.msra.mxu0 %v311
      %335 = vmatpush.msra.mxu0 %v310
      %336 = vmatpush.msra.mxu0 %v309
      %337 = vmatpush.msra.mxu0 %v308
      %338 = vmatmul.f32.gmra.mxu0 %v320
      %v339 = vpop.f32.mrf.mxu0
      %v340 = vadd.f32 0.0, %v339
      %341 = vdwg.mxu0
      %v342 = vadd.f32 %v317, %v340
      %v343 = vxor.u32 %v342, 2147483648
      %v344 = vmul.f32 %v343, 1.442695
      %v345 = vpow.pop %v344
      %v346 = vadd.f32 %v345, 1.0
      %v347 = vrcp.pop %v346
      %v348 = vmul.f32 %v346, %v347
      %v349 = vsub.f32 1.0, %v348
      %v350 = vmul.f32 %v347, %v349
      %v351 = vadd.f32 %v347, %v350
      %vm352 = vweird.f32 %v346
      %vm353 = vweird.f32 %v347
      %vm354 = vmor %vm352, %vm353
      %v355 = vsel %vm354, %v347, %v351
      %v356 = vand.u32 2147483647, %v346
      %vm357 = vcmp.eq.f32.partialorder %v356, 8.507059e+37
      %v358 = vand.u32 %v346, 2147483648
      %v359 = vor.u32 1.1754944e-38, %v358
      %v360 = vsel %vm357, %v359, %v355
      %v361 = vmul.f32 1.0, %v360
      %v362 = vtanh.pop %v342
      %364 = vrot.lane.b32.xlu0 %v313, 32
      %v365 = vpop.permute.xlu0 %364
      %v367 = vmul.f32 %v361, %v365
      %369 = vrot.lane.b32.xlu0 %v362, 64
      %v370 = vpop.permute.xlu0 %369
      %v372 = vmul.f32 %v361, %v370
      %374 = vrot.lane.b32.xlu0 %v372, 32
      %v375 = vpop.permute.xlu0 %374
      %v377 = vadd.f32 %v367, %v375
      %v378 = vtanh.pop %v377
      %380 = vrot.lane.b32.xlu0 %v378, 64
      %v381 = vpop.permute.xlu0 %380
      %v383 = vmul.f32 %v361, %v381
      %385 = vrot.lane.b32.xlu0 %v383, 32
      %v386 = vpop.permute.xlu0 %385
      %s388 = scalar_lea.vmem %s290, %s315
      %vm389 = vcmask 254976
      %390 = vst.msk [vmem:[%s388] sm:$0x3] %vm389, %v386
      %s391 = ssub.s32 1, %s19
      %s392 = smul.u32 %s19, 6
      %s393 = sadd.s32 %s391, %s392
      %s394 = smul.u32 %s393, 2
      %s395 = scalar_lea.vmem %s265, %s394
      %v396 = vld [vmem:[%s395] sm:$0x3]
      %v397 = vsel %vm318, %v386, 0
      %399 = vmatpush.msra.mxu0 0.0
      %400 = vmatpush.msra.mxu0 0.0
      %401 = vmatpush.msra.mxu0 0.0
      %402 = vmatpush.msra.mxu0 0.0
      %403 = vmatpush.msra.mxu0 0.0
      %404 = vmatpush.msra.mxu0 0.0
      %405 = vmatpush.msra.mxu0 0.0
      %406 = vmatpush.msra.mxu0 0.0
      %407 = vmatpush.msra.mxu0 0.0
      %408 = vmatpush.msra.mxu0 0.0
      %409 = vmatpush.msra.mxu0 0.0
      %410 = vmatpush.msra.mxu0 0.0
      %411 = vmatpush.msra.mxu0 %v311
      %412 = vmatpush.msra.mxu0 %v310
      %413 = vmatpush.msra.mxu0 %v309
      %414 = vmatpush.msra.mxu0 %v308
      %415 = vmatmul.f32.gmra.mxu0 %v397
      %v416 = vpop.f32.mrf.mxu0
      %v417 = vadd.f32 0.0, %v416
      %418 = vdwg.mxu0
      %v419 = vadd.f32 %v396, %v417
      %v420 = vxor.u32 %v419, 2147483648
      %v421 = vmul.f32 %v420, 1.442695
      %v422 = vpow.pop %v421
      %v423 = vadd.f32 %v422, 1.0
      %v424 = vrcp.pop %v423
      %v425 = vmul.f32 %v423, %v424
      %v426 = vsub.f32 1.0, %v425
      %v427 = vmul.f32 %v424, %v426
      %v428 = vadd.f32 %v424, %v427
      %vm429 = vweird.f32 %v423
      %vm430 = vweird.f32 %v424
      %vm431 = vmor %vm429, %vm430
      %v432 = vsel %vm431, %v424, %v428
      %v433 = vand.u32 2147483647, %v423
      %vm434 = vcmp.eq.f32.partialorder %v433, 8.507059e+37
      %v435 = vand.u32 %v423, 2147483648
      %v436 = vor.u32 1.1754944e-38, %v435
      %v437 = vsel %vm434, %v436, %v432
      %v438 = vmul.f32 1.0, %v437
      %v439 = vtanh.pop %v419
      %v440 = vmul.f32 %v438, %v377
      %442 = vrot.lane.b32.xlu0 %v439, 64
      %v443 = vpop.permute.xlu0 %442
      %v445 = vmul.f32 %v438, %v443
      %447 = vrot.lane.b32.xlu0 %v445, 32
      %v448 = vpop.permute.xlu0 %447
      %v450 = vadd.f32 %v440, %v448
      %v451 = vtanh.pop %v450
      %453 = vrot.lane.b32.xlu0 %v451, 64
      %v454 = vpop.permute.xlu0 %453
      %v456 = vmul.f32 %v438, %v454
      %458 = vrot.lane.b32.xlu0 %v456, 32
      %v459 = vpop.permute.xlu0 %458
      %s461 = scalar_lea.vmem %s290, %s394
      %462 = vst.msk [vmem:[%s461] sm:$0x3] %vm389, %v459
      %s463 = smul.u32 %s391, 2
      %s464 = smul.u32 %s19, 5
      %s465 = sadd.s32 %s463, %s464
      %s466 = smul.u32 %s465, 2
      %s467 = scalar_lea.vmem %s265, %s466
      %v468 = vld [vmem:[%s467] sm:$0x3]
      %v469 = vsel %vm318, %v459, 0
      %471 = vmatpush.msra.mxu0 0.0
      %472 = vmatpush.msra.mxu0 0.0
      %473 = vmatpush.msra.mxu0 0.0
      %474 = vmatpush.msra.mxu0 0.0
      %475 = vmatpush.msra.mxu0 0.0
      %476 = vmatpush.msra.mxu0 0.0
      %477 = vmatpush.msra.mxu0 0.0
      %478 = vmatpush.msra.mxu0 0.0
      %479 = vmatpush.msra.mxu0 0.0
      %480 = vmatpush.msra.mxu0 0.0
      %481 = vmatpush.msra.mxu0 0.0
      %482 = vmatpush.msra.mxu0 0.0
      %483 = vmatpush.msra.mxu0 %v311
      %484 = vmatpush.msra.mxu0 %v310
      %485 = vmatpush.msra.mxu0 %v309
      %486 = vmatpush.msra.mxu0 %v308
      %487 = vmatmul.f32.gmra.mxu0 %v469
      %v488 = vpop.f32.mrf.mxu0
      %v489 = vadd.f32 0.0, %v488
      %490 = vdwg.mxu0
      %v491 = vadd.f32 %v468, %v489
      %v492 = vxor.u32 %v491, 2147483648
      %v493 = vmul.f32 %v492, 1.442695
      %v494 = vpow.pop %v493
      %v495 = vadd.f32 %v494, 1.0
      %v496 = vrcp.pop %v495
      %v497 = vmul.f32 %v495, %v496
      %v498 = vsub.f32 1.0, %v497
      %v499 = vmul.f32 %v496, %v498
      %v500 = vadd.f32 %v496, %v499
      %vm501 = vweird.f32 %v495
      %vm502 = vweird.f32 %v496
      %vm503 = vmor %vm501, %vm502
      %v504 = vsel %vm503, %v496, %v500
      %v505 = vand.u32 2147483647, %v495
      %vm506 = vcmp.eq.f32.partialorder %v505, 8.507059e+37
      %v507 = vand.u32 %v495, 2147483648
      %v508 = vor.u32 1.1754944e-38, %v507
      %v509 = vsel %vm506, %v508, %v504
      %v510 = vmul.f32 1.0, %v509
      %v511 = vtanh.pop %v491
      %v512 = vmul.f32 %v510, %v450
      %514 = vrot.lane.b32.xlu0 %v511, 64
      %v515 = vpop.permute.xlu0 %514
      %v517 = vmul.f32 %v510, %v515
      %519 = vrot.lane.b32.xlu0 %v517, 32
      %v520 = vpop.permute.xlu0 %519
      %v522 = vadd.f32 %v512, %v520
      %v523 = vtanh.pop %v522
      %525 = vrot.lane.b32.xlu0 %v523, 64
      %v526 = vpop.permute.xlu0 %525
      %v528 = vmul.f32 %v510, %v526
      %530 = vrot.lane.b32.xlu0 %v528, 32
      %v531 = vpop.permute.xlu0 %530
      %s533 = scalar_lea.vmem %s290, %s466
      %534 = vst.msk [vmem:[%s533] sm:$0x3] %vm389, %v531
      %s535 = smul.u32 %s391, 3
      %s536 = smul.u32 %s19, 4
      %s537 = sadd.s32 %s535, %s536
      %s538 = smul.u32 %s537, 2
      %s539 = scalar_lea.vmem %s265, %s538
      %v540 = vld [vmem:[%s539] sm:$0x3]
      %v541 = vsel %vm318, %v531, 0
      %543 = vmatpush.msra.mxu0 0.0
      %544 = vmatpush.msra.mxu0 0.0
      %545 = vmatpush.msra.mxu0 0.0
      %546 = vmatpush.msra.mxu0 0.0
      %547 = vmatpush.msra.mxu0 0.0
      %548 = vmatpush.msra.mxu0 0.0
      %549 = vmatpush.msra.mxu0 0.0
      %550 = vmatpush.msra.mxu0 0.0
      %551 = vmatpush.msra.mxu0 0.0
      %552 = vmatpush.msra.mxu0 0.0
      %553 = vmatpush.msra.mxu0 0.0
      %554 = vmatpush.msra.mxu0 0.0
      %555 = vmatpush.msra.mxu0 %v311
      %556 = vmatpush.msra.mxu0 %v310
      %557 = vmatpush.msra.mxu0 %v309
      %558 = vmatpush.msra.mxu0 %v308
      %559 = vmatmul.f32.gmra.mxu0 %v541
      %v560 = vpop.f32.mrf.mxu0
      %v561 = vadd.f32 0.0, %v560
      %562 = vdwg.mxu0
      %v563 = vadd.f32 %v540, %v561
      %v564 = vxor.u32 %v563, 2147483648
      %v565 = vmul.f32 %v564, 1.442695
      %v566 = vpow.pop %v565
      %v567 = vadd.f32 %v566, 1.0
      %v568 = vrcp.pop %v567
      %v569 = vmul.f32 %v567, %v568
      %v570 = vsub.f32 1.0, %v569
      %v571 = vmul.f32 %v568, %v570
      %v572 = vadd.f32 %v568, %v571
      %vm573 = vweird.f32 %v567
      %vm574 = vweird.f32 %v568
      %vm575 = vmor %vm573, %vm574
      %v576 = vsel %vm575, %v568, %v572
      %v577 = vand.u32 2147483647, %v567
      %vm578 = vcmp.eq.f32.partialorder %v577, 8.507059e+37
      %v579 = vand.u32 %v567, 2147483648
      %v580 = vor.u32 1.1754944e-38, %v579
      %v581 = vsel %vm578, %v580, %v576
      %v582 = vmul.f32 1.0, %v581
      %v583 = vtanh.pop %v563
      %v584 = vmul.f32 %v582, %v522
      %586 = vrot.lane.b32.xlu0 %v583, 64
      %v587 = vpop.permute.xlu0 %586
      %v589 = vmul.f32 %v582, %v587
      %591 = vrot.lane.b32.xlu0 %v589, 32
      %v592 = vpop.permute.xlu0 %591
      %v594 = vadd.f32 %v584, %v592
      %v595 = vtanh.pop %v594
      %597 = vrot.lane.b32.xlu0 %v595, 64
      %v598 = vpop.permute.xlu0 %597
      %v600 = vmul.f32 %v582, %v598
      %602 = vrot.lane.b32.xlu0 %v600, 32
      %v603 = vpop.permute.xlu0 %602
      %s605 = scalar_lea.vmem %s290, %s538
      %606 = vst.msk [vmem:[%s605] sm:$0x3] %vm389, %v603
      %s607 = smul.u32 %s391, 4
      %s608 = smul.u32 %s19, 3
      %s609 = sadd.s32 %s607, %s608
      %s610 = smul.u32 %s609, 2
      %s611 = scalar_lea.vmem %s265, %s610
      %v612 = vld [vmem:[%s611] sm:$0x3]
      %v613 = vsel %vm318, %v603, 0
      %615 = vmatpush.msra.mxu0 0.0
      %616 = vmatpush.msra.mxu0 0.0
      %617 = vmatpush.msra.mxu0 0.0
      %618 = vmatpush.msra.mxu0 0.0
      %619 = vmatpush.msra.mxu0 0.0
      %620 = vmatpush.msra.mxu0 0.0
      %621 = vmatpush.msra.mxu0 0.0
      %622 = vmatpush.msra.mxu0 0.0
      %623 = vmatpush.msra.mxu0 0.0
      %624 = vmatpush.msra.mxu0 0.0
      %625 = vmatpush.msra.mxu0 0.0
      %626 = vmatpush.msra.mxu0 0.0
      %627 = vmatpush.msra.mxu0 %v311
      %628 = vmatpush.msra.mxu0 %v310
      %629 = vmatpush.msra.mxu0 %v309
      %630 = vmatpush.msra.mxu0 %v308
      %631 = vmatmul.f32.gmra.mxu0 %v613
      %v632 = vpop.f32.mrf.mxu0
      %v633 = vadd.f32 0.0, %v632
      %634 = vdwg.mxu0
      %v635 = vadd.f32 %v612, %v633
      %v636 = vxor.u32 %v635, 2147483648
      %v637 = vmul.f32 %v636, 1.442695
      %v638 = vpow.pop %v637
      %v639 = vadd.f32 %v638, 1.0
      %v640 = vrcp.pop %v639
      %v641 = vmul.f32 %v639, %v640
      %v642 = vsub.f32 1.0, %v641
      %v643 = vmul.f32 %v640, %v642
      %v644 = vadd.f32 %v640, %v643
      %vm645 = vweird.f32 %v639
      %vm646 = vweird.f32 %v640
      %vm647 = vmor %vm645, %vm646
      %v648 = vsel %vm647, %v640, %v644
      %v649 = vand.u32 2147483647, %v639
      %vm650 = vcmp.eq.f32.partialorder %v649, 8.507059e+37
      %v651 = vand.u32 %v639, 2147483648
      %v652 = vor.u32 1.1754944e-38, %v651
      %v653 = vsel %vm650, %v652, %v648
      %v654 = vmul.f32 1.0, %v653
      %v655 = vtanh.pop %v635
      %v656 = vmul.f32 %v654, %v594
      %658 = vrot.lane.b32.xlu0 %v655, 64
      %v659 = vpop.permute.xlu0 %658
      %v661 = vmul.f32 %v654, %v659
      %663 = vrot.lane.b32.xlu0 %v661, 32
      %v664 = vpop.permute.xlu0 %663
      %v666 = vadd.f32 %v656, %v664
      %v667 = vtanh.pop %v666
      %669 = vrot.lane.b32.xlu0 %v667, 64
      %v670 = vpop.permute.xlu0 %669
      %v672 = vmul.f32 %v654, %v670
      %674 = vrot.lane.b32.xlu0 %v672, 32
      %v675 = vpop.permute.xlu0 %674
      %s677 = scalar_lea.vmem %s290, %s610
      %678 = vst.msk [vmem:[%s677] sm:$0x3] %vm389, %v675
      %s679 = smul.u32 %s391, 5
      %s680 = smul.u32 %s19, 2
      %s681 = sadd.s32 %s679, %s680
      %s682 = smul.u32 %s681, 2
      %s683 = scalar_lea.vmem %s265, %s682
      %v684 = vld [vmem:[%s683] sm:$0x3]
      %v685 = vsel %vm318, %v675, 0
      %687 = vmatpush.msra.mxu0 0.0
      %688 = vmatpush.msra.mxu0 0.0
      %689 = vmatpush.msra.mxu0 0.0
      %690 = vmatpush.msra.mxu0 0.0
      %691 = vmatpush.msra.mxu0 0.0
      %692 = vmatpush.msra.mxu0 0.0
      %693 = vmatpush.msra.mxu0 0.0
      %694 = vmatpush.msra.mxu0 0.0
      %695 = vmatpush.msra.mxu0 0.0
      %696 = vmatpush.msra.mxu0 0.0
      %697 = vmatpush.msra.mxu0 0.0
      %698 = vmatpush.msra.mxu0 0.0
      %699 = vmatpush.msra.mxu0 %v311
      %700 = vmatpush.msra.mxu0 %v310
      %701 = vmatpush.msra.mxu0 %v309
      %702 = vmatpush.msra.mxu0 %v308
      %703 = vmatmul.f32.gmra.mxu0 %v685
      %v704 = vpop.f32.mrf.mxu0
      %v705 = vadd.f32 0.0, %v704
      %706 = vdwg.mxu0
      %v707 = vadd.f32 %v684, %v705
      %v708 = vxor.u32 %v707, 2147483648
      %v709 = vmul.f32 %v708, 1.442695
      %v710 = vpow.pop %v709
      %v711 = vadd.f32 %v710, 1.0
      %v712 = vrcp.pop %v711
      %v713 = vmul.f32 %v711, %v712
      %v714 = vsub.f32 1.0, %v713
      %v715 = vmul.f32 %v712, %v714
      %v716 = vadd.f32 %v712, %v715
      %vm717 = vweird.f32 %v711
      %vm718 = vweird.f32 %v712
      %vm719 = vmor %vm717, %vm718
      %v720 = vsel %vm719, %v712, %v716
      %v721 = vand.u32 2147483647, %v711
      %vm722 = vcmp.eq.f32.partialorder %v721, 8.507059e+37
      %v723 = vand.u32 %v711, 2147483648
      %v724 = vor.u32 1.1754944e-38, %v723
      %v725 = vsel %vm722, %v724, %v720
      %v726 = vmul.f32 1.0, %v725
      %v727 = vtanh.pop %v707
      %v728 = vmul.f32 %v726, %v666
      %730 = vrot.lane.b32.xlu0 %v727, 64
      %v731 = vpop.permute.xlu0 %730
      %v733 = vmul.f32 %v726, %v731
      %735 = vrot.lane.b32.xlu0 %v733, 32
      %v736 = vpop.permute.xlu0 %735
      %v738 = vadd.f32 %v728, %v736
      %v739 = vtanh.pop %v738
      %741 = vrot.lane.b32.xlu0 %v739, 64
      %v742 = vpop.permute.xlu0 %741
      %v744 = vmul.f32 %v726, %v742
      %746 = vrot.lane.b32.xlu0 %v744, 32
      %v747 = vpop.permute.xlu0 %746
      %s749 = scalar_lea.vmem %s290, %s682
      %750 = vst.msk [vmem:[%s749] sm:$0x3] %vm389, %v747
      %s751 = smul.u32 %s391, 6
      %s752 = sadd.s32 %s751, %s19
      %s753 = smul.u32 %s752, 2
      %s754 = scalar_lea.vmem %s265, %s753
      %v755 = vld [vmem:[%s754] sm:$0x3]
      %v756 = vsel %vm318, %v747, 0
      %758 = vmatpush.msra.mxu0 0.0
      %759 = vmatpush.msra.mxu0 0.0
      %760 = vmatpush.msra.mxu0 0.0
      %761 = vmatpush.msra.mxu0 0.0
      %762 = vmatpush.msra.mxu0 0.0
      %763 = vmatpush.msra.mxu0 0.0
      %764 = vmatpush.msra.mxu0 0.0
      %765 = vmatpush.msra.mxu0 0.0
      %766 = vmatpush.msra.mxu0 0.0
      %767 = vmatpush.msra.mxu0 0.0
      %768 = vmatpush.msra.mxu0 0.0
      %769 = vmatpush.msra.mxu0 0.0
      %770 = vmatpush.msra.mxu0 %v311
      %771 = vmatpush.msra.mxu0 %v310
      %772 = vmatpush.msra.mxu0 %v309
      %773 = vmatpush.msra.mxu0 %v308
      %774 = vmatmul.f32.gmra.mxu0 %v756
      %v775 = vpop.f32.mrf.mxu0
      %v776 = vadd.f32 0.0, %v775
      %777 = vdwg.mxu0
      %v778 = vadd.f32 %v755, %v776
      %v779 = vxor.u32 %v778, 2147483648
      %v780 = vmul.f32 %v779, 1.442695
      %v781 = vpow.pop %v780
      %v782 = vadd.f32 %v781, 1.0
      %v783 = vrcp.pop %v782
      %v784 = vmul.f32 %v782, %v783
      %v785 = vsub.f32 1.0, %v784
      %v786 = vmul.f32 %v783, %v785
      %v787 = vadd.f32 %v783, %v786
      %vm788 = vweird.f32 %v782
      %vm789 = vweird.f32 %v783
      %vm790 = vmor %vm788, %vm789
      %v791 = vsel %vm790, %v783, %v787
      %v792 = vand.u32 2147483647, %v782
      %vm793 = vcmp.eq.f32.partialorder %v792, 8.507059e+37
      %v794 = vand.u32 %v782, 2147483648
      %v795 = vor.u32 1.1754944e-38, %v794
      %v796 = vsel %vm793, %v795, %v791
      %v797 = vmul.f32 1.0, %v796
      %v798 = vtanh.pop %v778
      %v799 = vmul.f32 %v797, %v738
      %801 = vrot.lane.b32.xlu0 %v798, 64
      %v802 = vpop.permute.xlu0 %801
      %v804 = vmul.f32 %v797, %v802
      %806 = vrot.lane.b32.xlu0 %v804, 32
      %v807 = vpop.permute.xlu0 %806
      %v809 = vadd.f32 %v799, %v807
      %v810 = vtanh.pop %v809
      %812 = vrot.lane.b32.xlu0 %v810, 64
      %v813 = vpop.permute.xlu0 %812
      %v815 = vmul.f32 %v797, %v813
      %817 = vrot.lane.b32.xlu0 %v815, 32
      %v818 = vpop.permute.xlu0 %817
      %s820 = scalar_lea.vmem %s290, %s753
      %821 = vst.msk [vmem:[%s820] sm:$0x3] %vm389, %v818
      %s822 = smul.u32 %s391, 7
      %s823 = smul.u32 %s822, 2
      %s824 = scalar_lea.vmem %s265, %s823
      %v825 = vld [vmem:[%s824] sm:$0x3]
      %v826 = vsel %vm318, %v818, 0
      %828 = vmatpush.msra.mxu0 0.0
      %829 = vmatpush.msra.mxu0 0.0
      %830 = vmatpush.msra.mxu0 0.0
      %831 = vmatpush.msra.mxu0 0.0
      %832 = vmatpush.msra.mxu0 0.0
      %833 = vmatpush.msra.mxu0 0.0
      %834 = vmatpush.msra.mxu0 0.0
      %835 = vmatpush.msra.mxu0 0.0
      %836 = vmatpush.msra.mxu0 0.0
      %837 = vmatpush.msra.mxu0 0.0
      %838 = vmatpush.msra.mxu0 0.0
      %839 = vmatpush.msra.mxu0 0.0
      %840 = vmatpush.msra.mxu0 %v311
      %841 = vmatpush.msra.mxu0 %v310
      %842 = vmatpush.msra.mxu0 %v309
      %843 = vmatpush.msra.mxu0 %v308
      %844 = vmatmul.f32.gmra.mxu0 %v826
      %v845 = vpop.f32.mrf.mxu0
      %v846 = vadd.f32 0.0, %v845
      %847 = vdwg.mxu0
      %v848 = vadd.f32 %v825, %v846
      %v849 = vxor.u32 %v848, 2147483648
      %v850 = vmul.f32 %v849, 1.442695
      %v851 = vpow.pop %v850
      %v852 = vadd.f32 %v851, 1.0
      %v853 = vrcp.pop %v852
      %v854 = vmul.f32 %v852, %v853
      %v855 = vsub.f32 1.0, %v854
      %v856 = vmul.f32 %v853, %v855
      %v857 = vadd.f32 %v853, %v856
      %vm858 = vweird.f32 %v852
      %vm859 = vweird.f32 %v853
      %vm860 = vmor %vm858, %vm859
      %v861 = vsel %vm860, %v853, %v857
      %v862 = vand.u32 2147483647, %v852
      %vm863 = vcmp.eq.f32.partialorder %v862, 8.507059e+37
      %v864 = vand.u32 %v852, 2147483648
      %v865 = vor.u32 1.1754944e-38, %v864
      %v866 = vsel %vm863, %v865, %v861
      %v867 = vmul.f32 1.0, %v866
      %v868 = vtanh.pop %v848
      %v869 = vmul.f32 %v867, %v809
      %871 = vrot.lane.b32.xlu0 %v868, 64
      %v872 = vpop.permute.xlu0 %871
      %v874 = vmul.f32 %v867, %v872
      %876 = vrot.lane.b32.xlu0 %v874, 32
      %v877 = vpop.permute.xlu0 %876
      %v879 = vadd.f32 %v869, %v877
      %v880 = vtanh.pop %v879
      %882 = vrot.lane.b32.xlu0 %v880, 64
      %v883 = vpop.permute.xlu0 %882
      %v885 = vmul.f32 %v867, %v883
      %887 = vrot.lane.b32.xlu0 %v885, 32
      %v888 = vpop.permute.xlu0 %887
      %s890 = scalar_lea.vmem %s290, %s823
      %891 = vst.msk [vmem:[%s890] sm:$0x3] %vm389, %v888
      %892 = vst.msk [vmem:[#allocation2] sm:$0x3] %vm389, %v888
      %894 = vrot.lane.b32.xlu0 %v879, 96
      %v895 = vpop.permute.xlu0 %894
      %897 = vst.msk [vmem:[#allocation3] sm:$0x3] %vm389, %v895
      // Predicated region
      $region33: #{lstm_feature_extractor.2} parent=27 // pred_check
        %p898 = pneg %p301
      $region34: #{lstm_feature_extractor.2} parent=27 // pred_check_branch
        %900 = sbr.rel (%p898) target = $region36
      $region35: #{lstm_feature_extractor.2} parent=27 // pred_region
        %901 = vst.msk [vmem:[%s300] sm:$0x3] %vm389, %v888
      $region36: #{lstm_feature_extractor.2} parent=27 // pred_fallthru
        _
      %s902 = ssub.s32 1, %s19
      %s903 = smul.u32 %s902, %s20
      %s904 = ssub.s32 0, %s20
      %s905 = smul.u32 %s19, %s904
      %s906 = sadd.s32 %s903, %s905
      %s907 = smul.u32 8, %s906
      %p908 = scmp.lt.s32.totalorder %s19, 1
      %s909 = scalar_select %p908, %s19, 1
      %p910 = scmp.lt.s32.totalorder %s907, 7
      %s911 = scalar_select %p910, %s907, 7
      %s912 = smul.addr %s909, 8
      %s913 = sadd.s32 %s911, %s912
      %s914 = smul.addr %s913, 2
      %s915 = scalar_lea.vmem %s2, %s914
      %p916 = scmp.lt.s32.totalorder %s19, 1
      %s917 = scalar_select %p916, %s19, 1
      %s918 = smul.addr %s917, 2
      %s919 = scalar_lea.vmem %s3, %s918
      // Predicated region
      $region37: #{lstm_feature_extractor.2} parent=27 // pred_check
        %p920 = pneg %p121
      $region38: #{lstm_feature_extractor.2} parent=27 // pred_check_branch
        %922 = sbr.rel (%p920) target = $region40
      $region39: #{lstm_feature_extractor.2} parent=27 // pred_region
        %s923 = ssub.s32 1, %s19
        %s924 = smul.u32 %s923, %s20
        %s925 = ssub.s32 0, %s20
        %s926 = smul.u32 %s19, %s925
        %s927 = sadd.s32 %s924, %s926
        %s928 = smul.u32 8, %s927
      $region40: #{lstm_feature_extractor.2} parent=27 // pred_fallthru
        _
      // Predicated region
      $region41: #{lstm_feature_extractor.2} parent=27 // pred_check
        %p929 = pneg %p147
      $region42: #{lstm_feature_extractor.2} parent=27 // pred_check_branch
        %931 = sbr.rel (%p929) target = $region44
      $region43: #{lstm_feature_extractor.2} parent=27 // pred_region
        _
      $region44: #{lstm_feature_extractor.2} parent=27 // pred_fallthru
        _
    $region28: #{lstm_feature_extractor.2} parent=5 // pred_fallthru
      _
    %p932 = scmp.le.s32.totalorder 2, %s10
    // Predicated region
    $region45: #{lstm_feature_extractor.2} parent=5 // pred_check
      %p933 = pneg %p932
    $region46: #{lstm_feature_extractor.2} parent=5 // pred_check_branch
      %935 = sbr.rel (%p933) target = $region48
    $region47: #{lstm_feature_extractor.2} parent=5 // pred_region
      %s936 = ssub.s32 %s10, 2
      // Predicated region
      $region49: #{lstm_feature_extractor.2} parent=47 // pred_check
        %p937 = pneg %p127
      $region50: #{lstm_feature_extractor.2} parent=47 // pred_check_branch
        %939 = sbr.rel (%p937) target = $region52
      $region51: #{lstm_feature_extractor.2} parent=47 // pred_region
        %s940 = ssub.s32 1, %s21
        %s941 = smul.u32 %s940, %s22
        %s942 = ssub.s32 0, %s22
        %s943 = smul.u32 %s21, %s942
        %s944 = sadd.s32 %s941, %s943
        %s945 = smul.u32 8, %s944
        %p946 = scmp.lt.s32.totalorder %s21, 1
        %s947 = scalar_select %p946, %s21, 1
        %p948 = scmp.lt.s32.totalorder %s945, 7
        %s949 = scalar_select %p948, %s945, 7
        %s950 = smul.addr %s947, 8
        %s951 = sadd.s32 %s949, %s950
        %s952 = smul.addr %s951, 2
        %s953 = scalar_lea.vmem %s2, %s952
      $region52: #{lstm_feature_extractor.2} parent=47 // pred_fallthru
        _
      // Predicated region
      $region53: #{lstm_feature_extractor.2} parent=47 // pred_check
        %p954 = pneg %p153
      $region54: #{lstm_feature_extractor.2} parent=47 // pred_check_branch
        %956 = sbr.rel (%p954) target = $region56
      $region55: #{lstm_feature_extractor.2} parent=47 // pred_region
        %p957 = scmp.lt.s32.totalorder %s21, 1
        %s958 = scalar_select %p957, %s21, 1
        %s959 = smul.addr %s958, 2
        %s960 = scalar_lea.vmem %s3, %s959
      $region56: #{lstm_feature_extractor.2} parent=47 // pred_fallthru
        _
    $region48: #{lstm_feature_extractor.2} parent=5 // pred_fallthru
      _
  $region6: #{lstm_feature_extractor.2} parent=0 // loop_footer
    %s14 = sadd.s32 1, %s10
  $region7: #{lstm_feature_extractor.2} parent=0 // loop_footer_branch
    %9 = sbr.rel target = $region3
  $region8: #{lstm_feature_extractor.2} parent=0 // loop_exit
    _

// kernel: lstm_feature_extractor.3
$region0: #{lstm_feature_extractor.3}
  #allocation0 [shape = 'u32[]', space=smem, size = 0x4, offset = 0x4, fixed_abs, tag = 'smem constant byte address 0x4 - core index']
  #allocation1 [shape = 'u32[72,128]{1,0:T(1,128)}', space=vmem, size = 0x9000, scoped, tag = 'internal scratch']
  #allocation2 [shape = 'f32[2,32]{1,0:T(2,128)}', space=vmem, size = 0x400, scoped, tag = 'scratch operand']
  #allocation3 [shape = 'f32[2,32]{1,0:T(2,128)}', space=vmem, size = 0x400, scoped, tag = 'scratch operand']
  %s0 = inlined_call_operand.vmem [shape: f32[2,8,2,128], index: 0, kind: input, shape index: {}]
  %s1 = inlined_call_operand.vmem [shape: f32[2,32,128], index: 1, kind: input, shape index: {}]
  %s2 = inlined_call_operand.hbm [shape: f32[2,8,2,32], index: 2, kind: output, shape index: {0}]
  %s3 = inlined_call_operand.vmem [shape: f32[2,2,32], index: 3, kind: output, shape index: {1}]
  %4 = xla_tuple %s2, %s3
  %s5 = sld [smem:[#allocation0]]
  $region57: #{lstm_feature_extractor.3} parent=0
    _
  %s7 = ssub.s32 1, %s5
  %s8 = scalar_select 0, %s7, %s5
  $region1: #{lstm_feature_extractor.3} parent=0
    #allocation4 [shape = 'u8[16384]{0}', space=vmem, size = 0x4000, scoped, tag = 'output window, operand 0']
    #allocation5 [shape = 's32[2]{0}', space=sflag, size = 0x8, scoped, tag = 'scoped memory for lstm_feature_extractor.3']
    %9 = vsyncpa [#allocation5], 0
    %s10 = scalar_lea.sflag [#allocation5], 1
    %11 = vsyncpa %s10, 0
    loop: start=0, step=1, limit=4
    $region2: #{lstm_feature_extractor.3} parent=1 // loop_pre_header
      _
    $region3: #{lstm_feature_extractor.3} parent=1 // loop_header
      %s13 = sphi 0, %s17
      %p14 = scmp.ge.s32.totalorder %s13, 4
      %s20 = sphi 0, %s32
      %s21 = sphi 0, %s28
      %s22 = sphi 0, %s20
      %s23 = sphi 0, %s21
      %s24 = sphi 0, %s22
      %s25 = sphi 0, %s23
      %s47 = sphi 0, %s49
      %s50 = sphi 0, %s47
      %s51 = sphi 0, %s50
      %s67 = sphi 0, %s51
      %s73 = sphi 0, %s75
      %s76 = sphi 0, %s73
      %s77 = sphi 0, %s76
      %s93 = sphi 0, %s77
      %s111 = sphi 0, %s113
      %s114 = sphi 0, %s111
      %s115 = sphi 0, %s114
      %s131 = sphi 0, %s115
      %s137 = sphi 0, %s139
      %s140 = sphi 0, %s137
      %s141 = sphi 0, %s140
      %s157 = sphi 0, %s141
    $region4: #{lstm_feature_extractor.3} parent=1 // loop_header_branch
      %16 = sbr.rel (%p14) target = $region8
    $region5: #{lstm_feature_extractor.3} parent=1 // loop_body
      %s18 = ssub.s32 %s13, 1
      %s19 = ssub.s32 %s13, 2
      %s26 = sadd.s32 1, %s21
      %p27 = scmp.ge.s32.totalorder %s26, 1
      %s28 = scalar_select %p27, 0, %s26
      %s29 = sadd.s32 1, %s20
      %s30 = scalar_select %p27, %s29, %s20
      %p31 = scmp.ge.s32.totalorder %s30, 2
      %s32 = scalar_select %p31, 0, %s30
      %s33 = ssub.s32 1, %s20
      %s34 = smul.u32 %s33, %s21
      %s35 = ssub.s32 0, %s21
      %s36 = smul.u32 %s20, %s35
      %s37 = sadd.s32 %s34, %s36
      %s38 = ssub.s32 1, %s32
      %s39 = smul.u32 %s38, %s28
      %s40 = ssub.s32 0, %s28
      %s41 = smul.u32 %s32, %s40
      %s42 = sadd.s32 %s39, %s41
      %s43 = ssub.s32 %s20, %s32
      %s44 = ssub.s32 %s37, %s42
      %s45 = sor.u32 %s43, %s44
      %p46 = scmp.eq.s32.totalorder %s45, 0
      %s48 = sadd.s32 %s47, 1
      %s49 = scalar_select %p46, %s47, %s48
      %p52 = pneg %p46
      %p53 = scmp.eq.s32.totalorder %s13, 1
      %p54 = por %p52, %p53
      %p55 = scmp.ne.s32.totalorder %s47, %s50
      %p56 = scmp.eq.s32.totalorder %s13, 0
      %p57 = por %p55, %p56
      %p58 = scmp.ne.s32.totalorder %s47, %s50
      %p59 = scmp.eq.s32.totalorder %s18, 1
      %p60 = por %p58, %p59
      %p61 = scmp.ne.s32.totalorder %s50, %s51
      %p62 = scmp.eq.s32.totalorder %s18, 0
      %p63 = por %p61, %p62
      %p64 = scmp.ne.s32.totalorder %s50, %s51
      %p65 = scmp.eq.s32.totalorder %s19, 1
      %p66 = por %p64, %p65
      %p68 = scmp.ne.s32.totalorder %s51, %s67
      %p69 = scmp.eq.s32.totalorder %s19, 0
      %p70 = por %p68, %p69
      %s71 = ssub.s32 %s20, %s32
      %p72 = scmp.eq.s32.totalorder %s71, 0
      %s74 = sadd.s32 %s73, 1
      %s75 = scalar_select %p72, %s73, %s74
      %p78 = pneg %p72
      %p79 = scmp.eq.s32.totalorder %s13, 1
      %p80 = por %p78, %p79
      %p81 = scmp.ne.s32.totalorder %s73, %s76
      %p82 = scmp.eq.s32.totalorder %s13, 0
      %p83 = por %p81, %p82
      %p84 = scmp.ne.s32.totalorder %s73, %s76
      %p85 = scmp.eq.s32.totalorder %s18, 1
      %p86 = por %p84, %p85
      %p87 = scmp.ne.s32.totalorder %s76, %s77
      %p88 = scmp.eq.s32.totalorder %s18, 0
      %p89 = por %p87, %p88
      %p90 = scmp.ne.s32.totalorder %s76, %s77
      %p91 = scmp.eq.s32.totalorder %s19, 1
      %p92 = por %p90, %p91
      %p94 = scmp.ne.s32.totalorder %s77, %s93
      %p95 = scmp.eq.s32.totalorder %s19, 0
      %p96 = por %p94, %p95
      %s97 = ssub.s32 1, %s20
      %s98 = smul.u32 %s97, %s21
      %s99 = ssub.s32 0, %s21
      %s100 = smul.u32 %s20, %s99
      %s101 = sadd.s32 %s98, %s100
      %s102 = ssub.s32 1, %s32
      %s103 = smul.u32 %s102, %s28
      %s104 = ssub.s32 0, %s28
      %s105 = smul.u32 %s32, %s104
      %s106 = sadd.s32 %s103, %s105
      %s107 = ssub.s32 %s20, %s32
      %s108 = ssub.s32 %s101, %s106
      %s109 = sor.u32 %s107, %s108
      %p110 = scmp.eq.s32.totalorder %s109, 0
      %s112 = sadd.s32 %s111, 1
      %s113 = scalar_select %p110, %s111, %s112
      %p116 = pneg %p110
      %p117 = scmp.eq.s32.totalorder %s13, 1
      %p118 = por %p116, %p117
      %p119 = scmp.ne.s32.totalorder %s111, %s114
      %p120 = scmp.eq.s32.totalorder %s13, 0
      %p121 = por %p119, %p120
      %p122 = scmp.ne.s32.totalorder %s111, %s114
      %p123 = scmp.eq.s32.totalorder %s18, 1
      %p124 = por %p122, %p123
      %p125 = scmp.ne.s32.totalorder %s114, %s115
      %p126 = scmp.eq.s32.totalorder %s18, 0
      %p127 = por %p125, %p126
      %p128 = scmp.ne.s32.totalorder %s114, %s115
      %p129 = scmp.eq.s32.totalorder %s19, 1
      %p130 = por %p128, %p129
      %p132 = scmp.ne.s32.totalorder %s115, %s131
      %p133 = scmp.eq.s32.totalorder %s19, 0
      %p134 = por %p132, %p133
      %s135 = ssub.s32 %s20, %s32
      %p136 = scmp.eq.s32.totalorder %s135, 0
      %s138 = sadd.s32 %s137, 1
      %s139 = scalar_select %p136, %s137, %s138
      %p142 = pneg %p136
      %p143 = scmp.eq.s32.totalorder %s13, 1
      %p144 = por %p142, %p143
      %p145 = scmp.ne.s32.totalorder %s137, %s140
      %p146 = scmp.eq.s32.totalorder %s13, 0
      %p147 = por %p145, %p146
      %p148 = scmp.ne.s32.totalorder %s137, %s140
      %p149 = scmp.eq.s32.totalorder %s18, 1
      %p150 = por %p148, %p149
      %p151 = scmp.ne.s32.totalorder %s140, %s141
      %p152 = scmp.eq.s32.totalorder %s18, 0
      %p153 = por %p151, %p152
      %p154 = scmp.ne.s32.totalorder %s140, %s141
      %p155 = scmp.eq.s32.totalorder %s19, 1
      %p156 = por %p154, %p155
      %p158 = scmp.ne.s32.totalorder %s141, %s157
      %p159 = scmp.eq.s32.totalorder %s19, 0
      %p160 = por %p158, %p159
      %p161 = scmp.le.s32.totalorder 1, %s13
      %p162 = scmp.lt.s32.totalorder %s13, 3
      %p163 = pnand %p161, %p162
      %p164 = pneg %p163
      // Predicated region
      $region9: #{lstm_feature_extractor.3} parent=5 // pred_check
        _
      $region10: #{lstm_feature_extractor.3} parent=5 // pred_check_branch
        %166 = sbr.rel (%p163) target = $region12
      $region11: #{lstm_feature_extractor.3} parent=5 // pred_region
        %s167 = ssub.s32 %s13, 1
      $region12: #{lstm_feature_extractor.3} parent=5 // pred_fallthru
        _
      %p168 = scmp.lt.s32.totalorder %s13, 2
      // Predicated region
      $region13: #{lstm_feature_extractor.3} parent=5 // pred_check
        %p169 = pneg %p168
      $region14: #{lstm_feature_extractor.3} parent=5 // pred_check_branch
        %171 = sbr.rel (%p169) target = $region16
      $region15: #{lstm_feature_extractor.3} parent=5 // pred_region
        // Predicated region
        $region17: #{lstm_feature_extractor.3} parent=15 // pred_check
          %p172 = pneg %p57
        $region18: #{lstm_feature_extractor.3} parent=15 // pred_check_branch
          %174 = sbr.rel (%p172) target = $region20
        $region19: #{lstm_feature_extractor.3} parent=15 // pred_region
          %s175 = ssub.s32 1, %s20
          %s176 = smul.u32 %s175, %s21
          %s177 = ssub.s32 0, %s21
          %s178 = smul.u32 %s20, %s177
          %s179 = sadd.s32 %s176, %s178
          %s180 = smul.u32 8, %s179
          %p181 = scmp.lt.s32.totalorder %s20, 1
          %s182 = scalar_select %p181, %s20, 1
          %p183 = scmp.lt.s32.totalorder %s180, 7
          %s184 = scalar_select %p183, %s180, 7
          %s185 = smul.addr %s182, 8
          %s186 = sadd.s32 %s184, %s185
          %s187 = smul.addr %s186, 2
          %s188 = scalar_lea.vmem %s0, %s187
          %s189 = ssub.s32 1, %s20
          %s190 = smul.u32 %s189, %s21
          %s191 = ssub.s32 0, %s21
          %s192 = smul.u32 %s20, %s191
          %s193 = sadd.s32 %s190, %s192
          %s194 = smul.u32 8, %s193
        $region20: #{lstm_feature_extractor.3} parent=15 // pred_fallthru
          _
        // Predicated region
        $region21: #{lstm_feature_extractor.3} parent=15 // pred_check
          %p195 = pneg %p83
        $region22: #{lstm_feature_extractor.3} parent=15 // pred_check_branch
          %197 = sbr.rel (%p195) target = $region24
        $region23: #{lstm_feature_extractor.3} parent=15 // pred_region
          %p198 = scmp.lt.s32.totalorder %s20, 1
          %s199 = scalar_select %p198, %s20, 1
          %s200 = smul.addr %s199, 4
          %s201 = smul.addr %s200, 8
          %s202 = scalar_lea.vmem %s1, %s201
        $region24: #{lstm_feature_extractor.3} parent=15 // pred_fallthru
          _
      $region16: #{lstm_feature_extractor.3} parent=5 // pred_fallthru
        _
      %p203 = scmp.le.s32.totalorder 1, %s13
      %p204 = scmp.lt.s32.totalorder %s13, 3
      %p205 = pnand %p203, %p204
      %p206 = pneg %p205
      // Predicated region
      $region25: #{lstm_feature_extractor.3} parent=5 // pred_check
        _
      $region26: #{lstm_feature_extractor.3} parent=5 // pred_check_branch
        %208 = sbr.rel (%p205) target = $region28
      $region27: #{lstm_feature_extractor.3} parent=5 // pred_region
        %s209 = ssub.s32 %s13, 1
        %s210 = ssub.s32 1, %s22
        %s211 = smul.u32 %s210, %s23
        %s212 = ssub.s32 0, %s23
        %s213 = smul.u32 %s22, %s212
        %s214 = sadd.s32 %s211, %s213
        %s215 = smul.u32 8, %s214
        %p216 = scmp.lt.s32.totalorder %s22, 1
        %s217 = scalar_select %p216, %s22, 1
        %p218 = scmp.lt.s32.totalorder %s215, 7
        %s219 = scalar_select %p218, %s215, 7
        %s220 = smul.addr %s217, 8
        %s221 = sadd.s32 %s219, %s220
        %s222 = smul.addr %s221, 2
        %s223 = scalar_lea.vmem %s0, %s222
        %p224 = pneg %p63
        %p225 = pneg %p60
        %p226 = scmp.lt.s32.totalorder %s22, 1
        %s227 = scalar_select %p226, %s22, 1
        %s228 = smul.addr %s227, 4
        %s229 = smul.addr %s228, 8
        %s230 = scalar_lea.vmem %s1, %s229
        %p231 = pneg %p89
        %p232 = pneg %p86
        %p233 = pneg %p127
        %p234 = pneg %p124
        %s235 = sand.u32 %s114, 1
        %s236 = scalar_lea.sflag [#allocation5], %s235
        %s237 = sand.u32 %s114, 1
        %s238 = smul.addr %s237, 16
        %s239 = scalar_lea.vmem [#allocation4], %s238
        %p240 = pneg %p153
        %p241 = pneg %p150
        %p242 = scmp.lt.s32.totalorder %s22, 1
        %s243 = scalar_select %p242, %s22, 1
        %s244 = smul.addr %s243, 2
        %s245 = scalar_lea.vmem %s3, %s244
        %s246 = ssub.s32 1, %s22
        %s247 = smul.u32 %s246, %s23
        %s248 = ssub.s32 0, %s23
        %s249 = smul.u32 %s22, %s248
        %s250 = sadd.s32 %s247, %s249
        %s251 = smul.u32 8, %s250
        %p252 = scmp.lt.s32.totalorder %s22, 1
        %s253 = scalar_select %p252, %s22, 1
        %p254 = scmp.lt.s32.totalorder %s251, 7
        %s255 = scalar_select %p254, %s251, 7
        %s256 = smul.addr %s253, 8
        %s257 = sadd.s32 %s255, %s256
        %s258 = smul.addr %s257, 2
        %s259 = scalar_lea.vmem %s0, %s258
        %s260 = ssub.s32 1, %s22
        %s261 = smul.u32 %s260, %s23
        %s262 = ssub.s32 0, %s23
        %s263 = smul.u32 %s22, %s262
        %s264 = sadd.s32 %s261, %s263
        %s265 = smul.u32 8, %s264
        %p266 = scmp.lt.s32.totalorder %s22, 1
        %s267 = scalar_select %p266, %s22, 1
        %s268 = smul.addr %s267, 4
        %s269 = smul.addr %s268, 8
        %s270 = scalar_lea.vmem %s1, %s269
        %s271 = ssub.s32 1, %s22
        %s272 = smul.u32 %s271, %s23
        %s273 = ssub.s32 0, %s23
        %s274 = smul.u32 %s22, %s273
        %s275 = sadd.s32 %s272, %s274
        %s276 = smul.u32 8, %s275
        %p277 = scmp.lt.s32.totalorder %s22, 1
        %s278 = scalar_select %p277, %s22, 1
        %s279 = smul.addr %s278, 2
        %s280 = scalar_lea.vmem %s3, %s279
        %p281 = scmp.eq.s32.totalorder %s23, 0
        // Predicated region
        $region29: #{lstm_feature_extractor.3} parent=27 // pred_check
          %p282 = pneg %p281
        $region30: #{lstm_feature_extractor.3} parent=27 // pred_check_branch
          %284 = sbr.rel (%p282) target = $region32
        $region31: #{lstm_feature_extractor.3} parent=27 // pred_region
          %vm285 = vcmask 254976
          %286 = vst.msk [vmem:[#allocation2] sm:$0x3] %vm285, 0.0
          %287 = vst.msk [vmem:[#allocation3] sm:$0x3] %vm285, 0.0
        $region32: #{lstm_feature_extractor.3} parent=27 // pred_fallthru
          _
        %v288 = vld [vmem:[%s270] sm:$0xff]
        %v289 = vld [vmem:[%s270 + $0x8] sm:$0xff]
        %v290 = vld [vmem:[%s270 + $0x10] sm:$0xff]
        %v291 = vld [vmem:[%s270 + $0x18] sm:$0xff]
        %v292 = vld [vmem:[#allocation2] sm:$0x3]
        %v293 = vld [vmem:[#allocation3] sm:$0x3]
        %s294 = smul.u32 %s22, 7
        %s295 = smul.u32 %s294, 2
        %s296 = scalar_lea.vmem %s259, %s295
        %v297 = vld [vmem:[%s296] sm:$0x3]
        %vm298 = vcmask 261120
        %v300 = vsel %vm298, %v292, 0
        %302 = vmatpush.msra.mxu0 0.0
        %303 = vmatpush.msra.mxu0 0.0
        %304 = vmatpush.msra.mxu0 0.0
        %305 = vmatpush.msra.mxu0 0.0
        %306 = vmatpush.msra.mxu0 0.0
        %307 = vmatpush.msra.mxu0 0.0
        %308 = vmatpush.msra.mxu0 0.0
        %309 = vmatpush.msra.mxu0 0.0
        %310 = vmatpush.msra.mxu0 0.0
        %311 = vmatpush.msra.mxu0 0.0
        %312 = vmatpush.msra.mxu0 0.0
        %313 = vmatpush.msra.mxu0 0.0
        %314 = vmatpush.msra.mxu0 %v291
        %315 = vmatpush.msra.mxu0 %v290
        %316 = vmatpush.msra.mxu0 %v289
        %317 = vmatpush.msra.mxu0 %v288
        %318 = vmatmul.f32.gmra.mxu0 %v300
        %v319 = vpop.f32.mrf.mxu0
        %v320 = vadd.f32 0.0, %v319
        %321 = vdwg.mxu0
        %v322 = vadd.f32 %v297, %v320
        %v323 = vxor.u32 %v322, 2147483648
        %v324 = vmul.f32 %v323, 1.442695
        %v325 = vpow.pop %v324
        %v326 = vadd.f32 %v325, 1.0
        %v327 = vrcp.pop %v326
        %v328 = vmul.f32 %v326, %v327
        %v329 = vsub.f32 1.0, %v328
        %v330 = vmul.f32 %v327, %v329
        %v331 = vadd.f32 %v327, %v330
        %vm332 = vweird.f32 %v326
        %vm333 = vweird.f32 %v327
        %vm334 = vmor %vm332, %vm333
        %v335 = vsel %vm334, %v327, %v331
        %v336 = vand.u32 2147483647, %v326
        %vm337 = vcmp.eq.f32.partialorder %v336, 8.507059e+37
        %v338 = vand.u32 %v326, 2147483648
        %v339 = vor.u32 1.1754944e-38, %v338
        %v340 = vsel %vm337, %v339, %v335
        %v341 = vmul.f32 1.0, %v340
        %v342 = vtanh.pop %v322
        %344 = vrot.lane.b32.xlu0 %v293, 32
        %v345 = vpop.permute.xlu0 %344
        %v347 = vmul.f32 %v341, %v345
        %349 = vrot.lane.b32.xlu0 %v342, 64
        %v350 = vpop.permute.xlu0 %349
        %v352 = vmul.f32 %v341, %v350
        %354 = vrot.lane.b32.xlu0 %v352, 32
        %v355 = vpop.permute.xlu0 %354
        %v357 = vadd.f32 %v347, %v355
        %v358 = vtanh.pop %v357
        %360 = vrot.lane.b32.xlu0 %v358, 64
        %v361 = vpop.permute.xlu0 %360
        %v363 = vmul.f32 %v341, %v361
        %365 = vrot.lane.b32.xlu0 %v363, 32
        %v366 = vpop.permute.xlu0 %365
        %s368 = scalar_lea.vmem %s239, %s295 [#allocation4]
        %vm369 = vcmask 254976
        %370 = vst.msk [vmem:[%s368] sm:$0x3] %vm369, %v366
        %s371 = ssub.s32 1, %s22
        %s372 = smul.u32 %s22, 6
        %s373 = sadd.s32 %s371, %s372
        %s374 = smul.u32 %s373, 2
        %s375 = scalar_lea.vmem %s259, %s374
        %v376 = vld [vmem:[%s375] sm:$0x3]
        %v377 = vsel %vm298, %v366, 0
        %379 = vmatpush.msra.mxu0 0.0
        %380 = vmatpush.msra.mxu0 0.0
        %381 = vmatpush.msra.mxu0 0.0
        %382 = vmatpush.msra.mxu0 0.0
        %383 = vmatpush.msra.mxu0 0.0
        %384 = vmatpush.msra.mxu0 0.0
        %385 = vmatpush.msra.mxu0 0.0
        %386 = vmatpush.msra.mxu0 0.0
        %387 = vmatpush.msra.mxu0 0.0
        %388 = vmatpush.msra.mxu0 0.0
        %389 = vmatpush.msra.mxu0 0.0
        %390 = vmatpush.msra.mxu0 0.0
        %391 = vmatpush.msra.mxu0 %v291
        %392 = vmatpush.msra.mxu0 %v290
        %393 = vmatpush.msra.mxu0 %v289
        %394 = vmatpush.msra.mxu0 %v288
        %395 = vmatmul.f32.gmra.mxu0 %v377
        %v396 = vpop.f32.mrf.mxu0
        %v397 = vadd.f32 0.0, %v396
        %398 = vdwg.mxu0
        %v399 = vadd.f32 %v376, %v397
        %v400 = vxor.u32 %v399, 2147483648
        %v401 = vmul.f32 %v400, 1.442695
        %v402 = vpow.pop %v401
        %v403 = vadd.f32 %v402, 1.0
        %v404 = vrcp.pop %v403
        %v405 = vmul.f32 %v403, %v404
        %v406 = vsub.f32 1.0, %v405
        %v407 = vmul.f32 %v404, %v406
        %v408 = vadd.f32 %v404, %v407
        %vm409 = vweird.f32 %v403
        %vm410 = vweird.f32 %v404
        %vm411 = vmor %vm409, %vm410
        %v412 = vsel %vm411, %v404, %v408
        %v413 = vand.u32 2147483647, %v403
        %vm414 = vcmp.eq.f32.partialorder %v413, 8.507059e+37
        %v415 = vand.u32 %v403, 2147483648
        %v416 = vor.u32 1.1754944e-38, %v415
        %v417 = vsel %vm414, %v416, %v412
        %v418 = vmul.f32 1.0, %v417
        %v419 = vtanh.pop %v399
        %v420 = vmul.f32 %v418, %v357
        %422 = vrot.lane.b32.xlu0 %v419, 64
        %v423 = vpop.permute.xlu0 %422
        %v425 = vmul.f32 %v418, %v423
        %427 = vrot.lane.b32.xlu0 %v425, 32
        %v428 = vpop.permute.xlu0 %427
        %v430 = vadd.f32 %v420, %v428
        %v431 = vtanh.pop %v430
        %433 = vrot.lane.b32.xlu0 %v431, 64
        %v434 = vpop.permute.xlu0 %433
        %v436 = vmul.f32 %v418, %v434
        %438 = vrot.lane.b32.xlu0 %v436, 32
        %v439 = vpop.permute.xlu0 %438
        %s441 = scalar_lea.vmem %s239, %s374 [#allocation4]
        %442 = vst.msk [vmem:[%s441] sm:$0x3] %vm369, %v439
        %s443 = smul.u32 %s371, 2
        %s444 = smul.u32 %s22, 5
        %s445 = sadd.s32 %s443, %s444
        %s446 = smul.u32 %s445, 2
        %s447 = scalar_lea.vmem %s259, %s446
        %v448 = vld [vmem:[%s447] sm:$0x3]
        %v449 = vsel %vm298, %v439, 0
        %451 = vmatpush.msra.mxu0 0.0
        %452 = vmatpush.msra.mxu0 0.0
        %453 = vmatpush.msra.mxu0 0.0
        %454 = vmatpush.msra.mxu0 0.0
        %455 = vmatpush.msra.mxu0 0.0
        %456 = vmatpush.msra.mxu0 0.0
        %457 = vmatpush.msra.mxu0 0.0
        %458 = vmatpush.msra.mxu0 0.0
        %459 = vmatpush.msra.mxu0 0.0
        %460 = vmatpush.msra.mxu0 0.0
        %461 = vmatpush.msra.mxu0 0.0
        %462 = vmatpush.msra.mxu0 0.0
        %463 = vmatpush.msra.mxu0 %v291
        %464 = vmatpush.msra.mxu0 %v290
        %465 = vmatpush.msra.mxu0 %v289
        %466 = vmatpush.msra.mxu0 %v288
        %467 = vmatmul.f32.gmra.mxu0 %v449
        %v468 = vpop.f32.mrf.mxu0
        %v469 = vadd.f32 0.0, %v468
        %470 = vdwg.mxu0
        %v471 = vadd.f32 %v448, %v469
        %v472 = vxor.u32 %v471, 2147483648
        %v473 = vmul.f32 %v472, 1.442695
        %v474 = vpow.pop %v473
        %v475 = vadd.f32 %v474, 1.0
        %v476 = vrcp.pop %v475
        %v477 = vmul.f32 %v475, %v476
        %v478 = vsub.f32 1.0, %v477
        %v479 = vmul.f32 %v476, %v478
        %v480 = vadd.f32 %v476, %v479
        %vm481 = vweird.f32 %v475
        %vm482 = vweird.f32 %v476
        %vm483 = vmor %vm481, %vm482
        %v484 = vsel %vm483, %v476, %v480
        %v485 = vand.u32 2147483647, %v475
        %vm486 = vcmp.eq.f32.partialorder %v485, 8.507059e+37
        %v487 = vand.u32 %v475, 2147483648
        %v488 = vor.u32 1.1754944e-38, %v487
        %v489 = vsel %vm486, %v488, %v484
        %v490 = vmul.f32 1.0, %v489
        %v491 = vtanh.pop %v471
        %v492 = vmul.f32 %v490, %v430
        %494 = vrot.lane.b32.xlu0 %v491, 64
        %v495 = vpop.permute.xlu0 %494
        %v497 = vmul.f32 %v490, %v495
        %499 = vrot.lane.b32.xlu0 %v497, 32
        %v500 = vpop.permute.xlu0 %499
        %v502 = vadd.f32 %v492, %v500
        %v503 = vtanh.pop %v502
        %505 = vrot.lane.b32.xlu0 %v503, 64
        %v506 = vpop.permute.xlu0 %505
        %v508 = vmul.f32 %v490, %v506
        %510 = vrot.lane.b32.xlu0 %v508, 32
        %v511 = vpop.permute.xlu0 %510
        %s513 = scalar_lea.vmem %s239, %s446 [#allocation4]
        %514 = vst.msk [vmem:[%s513] sm:$0x3] %vm369, %v511
        %s515 = smul.u32 %s371, 3
        %s516 = smul.u32 %s22, 4
        %s517 = sadd.s32 %s515, %s516
        %s518 = smul.u32 %s517, 2
        %s519 = scalar_lea.vmem %s259, %s518
        %v520 = vld [vmem:[%s519] sm:$0x3]
        %v521 = vsel %vm298, %v511, 0
        %523 = vmatpush.msra.mxu0 0.0
        %524 = vmatpush.msra.mxu0 0.0
        %525 = vmatpush.msra.mxu0 0.0
        %526 = vmatpush.msra.mxu0 0.0
        %527 = vmatpush.msra.mxu0 0.0
        %528 = vmatpush.msra.mxu0 0.0
        %529 = vmatpush.msra.mxu0 0.0
        %530 = vmatpush.msra.mxu0 0.0
        %531 = vmatpush.msra.mxu0 0.0
        %532 = vmatpush.msra.mxu0 0.0
        %533 = vmatpush.msra.mxu0 0.0
        %534 = vmatpush.msra.mxu0 0.0
        %535 = vmatpush.msra.mxu0 %v291
        %536 = vmatpush.msra.mxu0 %v290
        %537 = vmatpush.msra.mxu0 %v289
        %538 = vmatpush.msra.mxu0 %v288
        %539 = vmatmul.f32.gmra.mxu0 %v521
        %v540 = vpop.f32.mrf.mxu0
        %v541 = vadd.f32 0.0, %v540
        %542 = vdwg.mxu0
        %v543 = vadd.f32 %v520, %v541
        %v544 = vxor.u32 %v543, 2147483648
        %v545 = vmul.f32 %v544, 1.442695
        %v546 = vpow.pop %v545
        %v547 = vadd.f32 %v546, 1.0
        %v548 = vrcp.pop %v547
        %v549 = vmul.f32 %v547, %v548
        %v550 = vsub.f32 1.0, %v549
        %v551 = vmul.f32 %v548, %v550
        %v552 = vadd.f32 %v548, %v551
        %vm553 = vweird.f32 %v547
        %vm554 = vweird.f32 %v548
        %vm555 = vmor %vm553, %vm554
        %v556 = vsel %vm555, %v548, %v552
        %v557 = vand.u32 2147483647, %v547
        %vm558 = vcmp.eq.f32.partialorder %v557, 8.507059e+37
        %v559 = vand.u32 %v547, 2147483648
        %v560 = vor.u32 1.1754944e-38, %v559
        %v561 = vsel %vm558, %v560, %v556
        %v562 = vmul.f32 1.0, %v561
        %v563 = vtanh.pop %v543
        %v564 = vmul.f32 %v562, %v502
        %566 = vrot.lane.b32.xlu0 %v563, 64
        %v567 = vpop.permute.xlu0 %566
        %v569 = vmul.f32 %v562, %v567
        %571 = vrot.lane.b32.xlu0 %v569, 32
        %v572 = vpop.permute.xlu0 %571
        %v574 = vadd.f32 %v564, %v572
        %v575 = vtanh.pop %v574
        %577 = vrot.lane.b32.xlu0 %v575, 64
        %v578 = vpop.permute.xlu0 %577
        %v580 = vmul.f32 %v562, %v578
        %582 = vrot.lane.b32.xlu0 %v580, 32
        %v583 = vpop.permute.xlu0 %582
        %s585 = scalar_lea.vmem %s239, %s518 [#allocation4]
        %586 = vst.msk [vmem:[%s585] sm:$0x3] %vm369, %v583
        %s587 = smul.u32 %s371, 4
        %s588 = smul.u32 %s22, 3
        %s589 = sadd.s32 %s587, %s588
        %s590 = smul.u32 %s589, 2
        %s591 = scalar_lea.vmem %s259, %s590
        %v592 = vld [vmem:[%s591] sm:$0x3]
        %v593 = vsel %vm298, %v583, 0
        %595 = vmatpush.msra.mxu0 0.0
        %596 = vmatpush.msra.mxu0 0.0
        %597 = vmatpush.msra.mxu0 0.0
        %598 = vmatpush.msra.mxu0 0.0
        %599 = vmatpush.msra.mxu0 0.0
        %600 = vmatpush.msra.mxu0 0.0
        %601 = vmatpush.msra.mxu0 0.0
        %602 = vmatpush.msra.mxu0 0.0
        %603 = vmatpush.msra.mxu0 0.0
        %604 = vmatpush.msra.mxu0 0.0
        %605 = vmatpush.msra.mxu0 0.0
        %606 = vmatpush.msra.mxu0 0.0
        %607 = vmatpush.msra.mxu0 %v291
        %608 = vmatpush.msra.mxu0 %v290
        %609 = vmatpush.msra.mxu0 %v289
        %610 = vmatpush.msra.mxu0 %v288
        %611 = vmatmul.f32.gmra.mxu0 %v593
        %v612 = vpop.f32.mrf.mxu0
        %v613 = vadd.f32 0.0, %v612
        %614 = vdwg.mxu0
        %v615 = vadd.f32 %v592, %v613
        %v616 = vxor.u32 %v615, 2147483648
        %v617 = vmul.f32 %v616, 1.442695
        %v618 = vpow.pop %v617
        %v619 = vadd.f32 %v618, 1.0
        %v620 = vrcp.pop %v619
        %v621 = vmul.f32 %v619, %v620
        %v622 = vsub.f32 1.0, %v621
        %v623 = vmul.f32 %v620, %v622
        %v624 = vadd.f32 %v620, %v623
        %vm625 = vweird.f32 %v619
        %vm626 = vweird.f32 %v620
        %vm627 = vmor %vm625, %vm626
        %v628 = vsel %vm627, %v620, %v624
        %v629 = vand.u32 2147483647, %v619
        %vm630 = vcmp.eq.f32.partialorder %v629, 8.507059e+37
        %v631 = vand.u32 %v619, 2147483648
        %v632 = vor.u32 1.1754944e-38, %v631
        %v633 = vsel %vm630, %v632, %v628
        %v634 = vmul.f32 1.0, %v633
        %v635 = vtanh.pop %v615
        %v636 = vmul.f32 %v634, %v574
        %638 = vrot.lane.b32.xlu0 %v635, 64
        %v639 = vpop.permute.xlu0 %638
        %v641 = vmul.f32 %v634, %v639
        %643 = vrot.lane.b32.xlu0 %v641, 32
        %v644 = vpop.permute.xlu0 %643
        %v646 = vadd.f32 %v636, %v644
        %v647 = vtanh.pop %v646
        %649 = vrot.lane.b32.xlu0 %v647, 64
        %v650 = vpop.permute.xlu0 %649
        %v652 = vmul.f32 %v634, %v650
        %654 = vrot.lane.b32.xlu0 %v652, 32
        %v655 = vpop.permute.xlu0 %654
        %s657 = scalar_lea.vmem %s239, %s590 [#allocation4]
        %658 = vst.msk [vmem:[%s657] sm:$0x3] %vm369, %v655
        %s659 = smul.u32 %s371, 5
        %s660 = smul.u32 %s22, 2
        %s661 = sadd.s32 %s659, %s660
        %s662 = smul.u32 %s661, 2
        %s663 = scalar_lea.vmem %s259, %s662
        %v664 = vld [vmem:[%s663] sm:$0x3]
        %v665 = vsel %vm298, %v655, 0
        %667 = vmatpush.msra.mxu0 0.0
        %668 = vmatpush.msra.mxu0 0.0
        %669 = vmatpush.msra.mxu0 0.0
        %670 = vmatpush.msra.mxu0 0.0
        %671 = vmatpush.msra.mxu0 0.0
        %672 = vmatpush.msra.mxu0 0.0
        %673 = vmatpush.msra.mxu0 0.0
        %674 = vmatpush.msra.mxu0 0.0
        %675 = vmatpush.msra.mxu0 0.0
        %676 = vmatpush.msra.mxu0 0.0
        %677 = vmatpush.msra.mxu0 0.0
        %678 = vmatpush.msra.mxu0 0.0
        %679 = vmatpush.msra.mxu0 %v291
        %680 = vmatpush.msra.mxu0 %v290
        %681 = vmatpush.msra.mxu0 %v289
        %682 = vmatpush.msra.mxu0 %v288
        %683 = vmatmul.f32.gmra.mxu0 %v665
        %v684 = vpop.f32.mrf.mxu0
        %v685 = vadd.f32 0.0, %v684
        %686 = vdwg.mxu0
        %v687 = vadd.f32 %v664, %v685
        %v688 = vxor.u32 %v687, 2147483648
        %v689 = vmul.f32 %v688, 1.442695
        %v690 = vpow.pop %v689
        %v691 = vadd.f32 %v690, 1.0
        %v692 = vrcp.pop %v691
        %v693 = vmul.f32 %v691, %v692
        %v694 = vsub.f32 1.0, %v693
        %v695 = vmul.f32 %v692, %v694
        %v696 = vadd.f32 %v692, %v695
        %vm697 = vweird.f32 %v691
        %vm698 = vweird.f32 %v692
        %vm699 = vmor %vm697, %vm698
        %v700 = vsel %vm699, %v692, %v696
        %v701 = vand.u32 2147483647, %v691
        %vm702 = vcmp.eq.f32.partialorder %v701, 8.507059e+37
        %v703 = vand.u32 %v691, 2147483648
        %v704 = vor.u32 1.1754944e-38, %v703
        %v705 = vsel %vm702, %v704, %v700
        %v706 = vmul.f32 1.0, %v705
        %v707 = vtanh.pop %v687
        %v708 = vmul.f32 %v706, %v646
        %710 = vrot.lane.b32.xlu0 %v707, 64
        %v711 = vpop.permute.xlu0 %710
        %v713 = vmul.f32 %v706, %v711
        %715 = vrot.lane.b32.xlu0 %v713, 32
        %v716 = vpop.permute.xlu0 %715
        %v718 = vadd.f32 %v708, %v716
        %v719 = vtanh.pop %v718
        %721 = vrot.lane.b32.xlu0 %v719, 64
        %v722 = vpop.permute.xlu0 %721
        %v724 = vmul.f32 %v706, %v722
        %726 = vrot.lane.b32.xlu0 %v724, 32
        %v727 = vpop.permute.xlu0 %726
        %s729 = scalar_lea.vmem %s239, %s662 [#allocation4]
        %730 = vst.msk [vmem:[%s729] sm:$0x3] %vm369, %v727
        %s731 = smul.u32 %s371, 6
        %s732 = sadd.s32 %s731, %s22
        %s733 = smul.u32 %s732, 2
        %s734 = scalar_lea.vmem %s259, %s733
        %v735 = vld [vmem:[%s734] sm:$0x3]
        %v736 = vsel %vm298, %v727, 0
        %738 = vmatpush.msra.mxu0 0.0
        %739 = vmatpush.msra.mxu0 0.0
        %740 = vmatpush.msra.mxu0 0.0
        %741 = vmatpush.msra.mxu0 0.0
        %742 = vmatpush.msra.mxu0 0.0
        %743 = vmatpush.msra.mxu0 0.0
        %744 = vmatpush.msra.mxu0 0.0
        %745 = vmatpush.msra.mxu0 0.0
        %746 = vmatpush.msra.mxu0 0.0
        %747 = vmatpush.msra.mxu0 0.0
        %748 = vmatpush.msra.mxu0 0.0
        %749 = vmatpush.msra.mxu0 0.0
        %750 = vmatpush.msra.mxu0 %v291
        %751 = vmatpush.msra.mxu0 %v290
        %752 = vmatpush.msra.mxu0 %v289
        %753 = vmatpush.msra.mxu0 %v288
        %754 = vmatmul.f32.gmra.mxu0 %v736
        %v755 = vpop.f32.mrf.mxu0
        %v756 = vadd.f32 0.0, %v755
        %757 = vdwg.mxu0
        %v758 = vadd.f32 %v735, %v756
        %v759 = vxor.u32 %v758, 2147483648
        %v760 = vmul.f32 %v759, 1.442695
        %v761 = vpow.pop %v760
        %v762 = vadd.f32 %v761, 1.0
        %v763 = vrcp.pop %v762
        %v764 = vmul.f32 %v762, %v763
        %v765 = vsub.f32 1.0, %v764
        %v766 = vmul.f32 %v763, %v765
        %v767 = vadd.f32 %v763, %v766
        %vm768 = vweird.f32 %v762
        %vm769 = vweird.f32 %v763
        %vm770 = vmor %vm768, %vm769
        %v771 = vsel %vm770, %v763, %v767
        %v772 = vand.u32 2147483647, %v762
        %vm773 = vcmp.eq.f32.partialorder %v772, 8.507059e+37
        %v774 = vand.u32 %v762, 2147483648
        %v775 = vor.u32 1.1754944e-38, %v774
        %v776 = vsel %vm773, %v775, %v771
        %v777 = vmul.f32 1.0, %v776
        %v778 = vtanh.pop %v758
        %v779 = vmul.f32 %v777, %v718
        %781 = vrot.lane.b32.xlu0 %v778, 64
        %v782 = vpop.permute.xlu0 %781
        %v784 = vmul.f32 %v777, %v782
        %786 = vrot.lane.b32.xlu0 %v784, 32
        %v787 = vpop.permute.xlu0 %786
        %v789 = vadd.f32 %v779, %v787
        %v790 = vtanh.pop %v789
        %792 = vrot.lane.b32.xlu0 %v790, 64
        %v793 = vpop.permute.xlu0 %792
        %v795 = vmul.f32 %v777, %v793
        %797 = vrot.lane.b32.xlu0 %v795, 32
        %v798 = vpop.permute.xlu0 %797
        %s800 = scalar_lea.vmem %s239, %s733 [#allocation4]
        %801 = vst.msk [vmem:[%s800] sm:$0x3] %vm369, %v798
        %s802 = smul.u32 %s371, 7
        %s803 = smul.u32 %s802, 2
        %s804 = scalar_lea.vmem %s259, %s803
        %v805 = vld [vmem:[%s804] sm:$0x3]
        %v806 = vsel %vm298, %v798, 0
        %808 = vmatpush.msra.mxu0 0.0
        %809 = vmatpush.msra.mxu0 0.0
        %810 = vmatpush.msra.mxu0 0.0
        %811 = vmatpush.msra.mxu0 0.0
        %812 = vmatpush.msra.mxu0 0.0
        %813 = vmatpush.msra.mxu0 0.0
        %814 = vmatpush.msra.mxu0 0.0
        %815 = vmatpush.msra.mxu0 0.0
        %816 = vmatpush.msra.mxu0 0.0
        %817 = vmatpush.msra.mxu0 0.0
        %818 = vmatpush.msra.mxu0 0.0
        %819 = vmatpush.msra.mxu0 0.0
        %820 = vmatpush.msra.mxu0 %v291
        %821 = vmatpush.msra.mxu0 %v290
        %822 = vmatpush.msra.mxu0 %v289
        %823 = vmatpush.msra.mxu0 %v288
        %824 = vmatmul.f32.gmra.mxu0 %v806
        %v825 = vpop.f32.mrf.mxu0
        %v826 = vadd.f32 0.0, %v825
        %827 = vdwg.mxu0
        %v828 = vadd.f32 %v805, %v826
        %v829 = vxor.u32 %v828, 2147483648
        %v830 = vmul.f32 %v829, 1.442695
        %v831 = vpow.pop %v830
        %v832 = vadd.f32 %v831, 1.0
        %v833 = vrcp.pop %v832
        %v834 = vmul.f32 %v832, %v833
        %v835 = vsub.f32 1.0, %v834
        %v836 = vmul.f32 %v833, %v835
        %v837 = vadd.f32 %v833, %v836
        %vm838 = vweird.f32 %v832
        %vm839 = vweird.f32 %v833
        %vm840 = vmor %vm838, %vm839
        %v841 = vsel %vm840, %v833, %v837
        %v842 = vand.u32 2147483647, %v832
        %vm843 = vcmp.eq.f32.partialorder %v842, 8.507059e+37
        %v844 = vand.u32 %v832, 2147483648
        %v845 = vor.u32 1.1754944e-38, %v844
        %v846 = vsel %vm843, %v845, %v841
        %v847 = vmul.f32 1.0, %v846
        %v848 = vtanh.pop %v828
        %v849 = vmul.f32 %v847, %v789
        %851 = vrot.lane.b32.xlu0 %v848, 64
        %v852 = vpop.permute.xlu0 %851
        %v854 = vmul.f32 %v847, %v852
        %856 = vrot.lane.b32.xlu0 %v854, 32
        %v857 = vpop.permute.xlu0 %856
        %v859 = vadd.f32 %v849, %v857
        %v860 = vtanh.pop %v859
        %862 = vrot.lane.b32.xlu0 %v860, 64
        %v863 = vpop.permute.xlu0 %862
        %v865 = vmul.f32 %v847, %v863
        %867 = vrot.lane.b32.xlu0 %v865, 32
        %v868 = vpop.permute.xlu0 %867
        %s870 = scalar_lea.vmem %s239, %s803 [#allocation4]
        %871 = vst.msk [vmem:[%s870] sm:$0x3] %vm369, %v868
        %872 = vst.msk [vmem:[#allocation2] sm:$0x3] %vm369, %v868
        %874 = vrot.lane.b32.xlu0 %v859, 96
        %v875 = vpop.permute.xlu0 %874
        %877 = vst.msk [vmem:[#allocation3] sm:$0x3] %vm369, %v875
        // Predicated region
        $region33: #{lstm_feature_extractor.3} parent=27 // pred_check
          %p878 = pneg %p281
        $region34: #{lstm_feature_extractor.3} parent=27 // pred_check_branch
          %880 = sbr.rel (%p878) target = $region36
        $region35: #{lstm_feature_extractor.3} parent=27 // pred_region
          %881 = vst.msk [vmem:[%s280] sm:$0x3] %vm369, %v868
        $region36: #{lstm_feature_extractor.3} parent=27 // pred_fallthru
          _
        %s882 = sand.u32 %s114, 1
        %s883 = scalar_lea.sflag [#allocation5], %s882
        %s884 = sand.u32 %s114, 1
        %s885 = smul.addr %s884, 16
        %s886 = scalar_lea.vmem [#allocation4], %s885
        %p887 = scmp.lt.s32.totalorder %s22, 1
        %s888 = scalar_select %p887, %s22, 1
        %s889 = smul.addr %s888, 2
        %s890 = scalar_lea.vmem %s3, %s889
        // Predicated region
        $region37: #{lstm_feature_extractor.3} parent=27 // pred_check
          %p891 = pneg %p124
        $region38: #{lstm_feature_extractor.3} parent=27 // pred_check_branch
          %893 = sbr.rel (%p891) target = $region40
        $region39: #{lstm_feature_extractor.3} parent=27 // pred_region
          %s894 = ssub.s32 1, %s22
          %s895 = smul.u32 %s894, %s23
          %s896 = ssub.s32 0, %s23
          %s897 = smul.u32 %s22, %s896
          %s898 = sadd.s32 %s895, %s897
          %s899 = smul.u32 8, %s898
          %901 = vsyncadd %s883, 0
          %s902 = smul.addr %s22, 8
          %s903 = sadd.s32 %s899, %s902
          %s904 = smul.addr %s903, 2
          %s905 = scalar_lea.hbm %s2, %s904
          %s906 = sshll.u32 %s886, 4
          %s907 = int_to_ptr.vmem [resolvable:$true] %s906
          %s908 = sshll.u32 %s905, 4
          %s909 = int_to_ptr.hbm [resolvable:$true] %s908
          %914 = dma.vmem_to_hbm [thread:$0]  %s907, 256, %s909, %s883, 32, 32, 2
        $region40: #{lstm_feature_extractor.3} parent=27 // pred_fallthru
          _
        // Predicated region
        $region41: #{lstm_feature_extractor.3} parent=27 // pred_check
          %p915 = pneg %p150
        $region42: #{lstm_feature_extractor.3} parent=27 // pred_check_branch
          %917 = sbr.rel (%p915) target = $region44
        $region43: #{lstm_feature_extractor.3} parent=27 // pred_region
          _
        $region44: #{lstm_feature_extractor.3} parent=27 // pred_fallthru
          _
      $region28: #{lstm_feature_extractor.3} parent=5 // pred_fallthru
        _
      %p918 = scmp.le.s32.totalorder 2, %s13
      // Predicated region
      $region45: #{lstm_feature_extractor.3} parent=5 // pred_check
        %p919 = pneg %p918
      $region46: #{lstm_feature_extractor.3} parent=5 // pred_check_branch
        %921 = sbr.rel (%p919) target = $region48
      $region47: #{lstm_feature_extractor.3} parent=5 // pred_region
        %s922 = ssub.s32 %s13, 2
        // Predicated region
        $region49: #{lstm_feature_extractor.3} parent=47 // pred_check
          %p923 = pneg %p130
        $region50: #{lstm_feature_extractor.3} parent=47 // pred_check_branch
          %925 = sbr.rel (%p923) target = $region52
        $region51: #{lstm_feature_extractor.3} parent=47 // pred_region
          %s926 = sand.u32 %s115, 1
          %s927 = scalar_lea.sflag [#allocation5], %s926
          %s928 = sand.u32 %s115, 1
          %s929 = smul.addr %s928, 16
          %s930 = scalar_lea.vmem [#allocation4], %s929
          %932 = dma.done %s927, 256
        $region52: #{lstm_feature_extractor.3} parent=47 // pred_fallthru
          _
        // Predicated region
        $region53: #{lstm_feature_extractor.3} parent=47 // pred_check
          %p933 = pneg %p156
        $region54: #{lstm_feature_extractor.3} parent=47 // pred_check_branch
          %935 = sbr.rel (%p933) target = $region56
        $region55: #{lstm_feature_extractor.3} parent=47 // pred_region
          %p936 = scmp.lt.s32.totalorder %s24, 1
          %s937 = scalar_select %p936, %s24, 1
          %s938 = smul.addr %s937, 2
          %s939 = scalar_lea.vmem %s3, %s938
        $region56: #{lstm_feature_extractor.3} parent=47 // pred_fallthru
          _
      $region48: #{lstm_feature_extractor.3} parent=5 // pred_fallthru
        _
    $region6: #{lstm_feature_extractor.3} parent=1 // loop_footer
      %s17 = sadd.s32 1, %s13
    $region7: #{lstm_feature_extractor.3} parent=1 // loop_footer_branch
      %12 = sbr.rel target = $region3
    $region8: #{lstm_feature_extractor.3} parent=1 // loop_exit
      _
    %940 = vsyncpa [#allocation5], 1
    %s941 = scalar_lea.sflag [#allocation5], 1
    %942 = vsyncpa %s941, 1

</llo_original>
